<compile_context>
chip_gen: v7x
topology: tpu7x:2x2x1
jax: 0.10.0
libtpu: 0.0.40
codegen_flags: <defaults>
</compile_context>

<pallas_src>
import functools

import jax
import jax.numpy as jnp
import numpy as np
from jax.experimental import pallas as pl
from jax.experimental.pallas import tpu as pltpu

EPS = 1e-6
KS = 7            # depthwise kernel size
PAD = KS // 2     # = 3


def gsau_kernel(x_ref, mavg_ref, wav_ref, bav_ref, wdw_ref, vshift_ref,
                bdw_ref, w2_ref, b2_ref, o_ref, dw_ref, *, C):
    NH, WC = x_ref.shape

    # ---- LayerNorm over channels via block-diagonal averaging matmuls.
    x = x_ref[...]
    mavg = mavg_ref[...]
    mu = jnp.dot(x, mavg, preferred_element_type=jnp.float32)
    xc = x - mu
    var = jnp.dot(xc * xc, mavg, preferred_element_type=jnp.float32)
    xn = xc * jax.lax.rsqrt(var + EPS)          # gamma/beta folded into Conv1

    # ---- Fused Conv1 (1x1, C -> 2C): one 256-wide MXU pass; `a` / gate `v`
    # are layout-free slices at the 128-lane vreg boundary.
    av = jnp.dot(xn, wav_ref[...], preferred_element_type=jnp.float32) + bav_ref[...]
    a = av[:, :WC]
    v = av[:, WC:]

    # ---- Depthwise 7x7 on `a`.
    # Horizontal taps: 7 lane rolls (stride C).  The horizontal edge mask is
    # already folded into the weight table, so no iota/compare/select here.
    hs = [a if dx == 0 else pltpu.roll(a, (-dx * C) % WC, 1)
          for dx in range(-PAD, PAD + 1)]
    wdw = wdw_ref[...]                           # (49, W*C) masked, lane-tiled
    # Per-dy row accumulators, parked in VMEM scratch (low vreg pressure).
    for dyi in range(KS):
        rowacc = hs[0] * wdw[dyi * KS]
        for dxi in range(1, KS):
            rowacc = rowacc + hs[dxi] * wdw[dyi * KS + dxi]
        dw_ref[pl.ds(dyi * NH, NH), :] = rowacc
    # 8th block of the stack holds the depthwise bias rows; vshift carries an
    # identity block for it, so vertical shift+mask+sum AND the bias add are a
    # single banded MXU matmul (K = 8*NH = 256).
    dw_ref[pl.ds(KS * NH, NH), :] = bdw_ref[...]
    a_dw = jnp.dot(vshift_ref[...], dw_ref[...], preferred_element_type=jnp.float32)

    # ---- Gate, Conv2 (residual `scale` folded into w2/b2), residual add
    # (x re-read here instead of being held live across the depthwise loop).
    gated = v * a_dw
    o_ref[...] = (jnp.dot(gated, w2_ref[...], preferred_element_type=jnp.float32)
                  + b2_ref[...] + x_ref[...])


@jax.jit
def gsau_forward(x_nhwc, w1, b1, wdw, bdw, w2, b2, gamma, beta, scale):
    N, H, W, C = x_nhwc.shape
    NH, WC = N * H, W * C
    x_flat = x_nhwc.reshape(NH, WC)

    eye_w = jnp.eye(W, dtype=jnp.float32)
    lane_tile = lambda vec: jnp.tile(vec.reshape(-1), W).reshape(1, -1)

    # Channel mean (LayerNorm) as a block-diagonal averaging matmul.
    mavg = jnp.kron(eye_w, jnp.full((C, C), 1.0 / C, jnp.float32))

    # Fold LayerNorm affine into the fused Conv1 weight/bias, then expand to
    # block-diagonal form.  Lanes [0, WC) produce `a`, lanes [WC, 2WC) the gate.
    w1_eff = gamma.reshape(C, 1) * w1                 # (C, 2C)
    b1_eff = b1 + beta.reshape(1, C) @ w1             # (1, 2C)
    wav_blk = jnp.concatenate(
        [jnp.kron(eye_w, w1_eff[:, :C]), jnp.kron(eye_w, w1_eff[:, C:])], axis=1)
    bav = jnp.concatenate(
        [lane_tile(b1_eff[:, :C]), lane_tile(b1_eff[:, C:])], axis=1)  # (1, 2WC)

    # Depthwise weights: lane-tiled to (49, W*C) with the horizontal edge mask
    # (0 <= w + dx < W) folded in at construction time.
    wpos = np.arange(WC) // C                          # pixel column per lane
    dx_t = np.arange(KS * KS) % KS - PAD               # dx of each tap
    hmask = ((wpos[None, :] + dx_t[:, None] >= 0)
             & (wpos[None, :] + dx_t[:, None] < W)).astype(np.float32)
    wdw_m = jnp.tile(wdw, (1, W)) * jnp.asarray(hmask)          # (49, W*C)
    bdw_rows = jnp.tile(lane_tile(bdw), (NH, 1))                # (NH, W*C)

    # Banded vertical shift+mask matrix (shifted identities, zeros at image /
    # batch boundaries on the fused N*H axis) + identity block for the bias.
    vs = np.zeros((NH, (KS + 1) * NH), np.float32)
    for r in range(NH):
        for dyi in range(KS):
            dy = dyi - PAD
            if 0 <= (r % H) + dy < H:
                vs[r, dyi * NH + r + dy] = 1.0
        vs[r, KS * NH + r] = 1.0                       # picks up the bias rows
    vshift = jnp.asarray(vs)                           # (NH, 8*NH) = (32, 256)

    # Fold the learnable residual scale into Conv2.
    w2_blk = jnp.kron(eye_w, w2 * scale.reshape(1, C))
    b2_t = lane_tile(b2 * scale)

    vmem = lambda: pl.BlockSpec(memory_space=pltpu.MemorySpace.VMEM)
    out_flat = pl.pallas_call(
        functools.partial(gsau_kernel, C=C),
        out_shape=jax.ShapeDtypeStruct((NH, WC), jnp.float32),
        in_specs=[vmem() for _ in range(9)],
        out_specs=vmem(),
        scratch_shapes=[pltpu.VMEM(((KS + 1) * NH, WC), jnp.float32)],
    )(x_flat, mavg, wav_blk, bav, wdw_m, vshift, bdw_rows, w2_blk, b2_t)
    return out_flat.reshape(N, H, W, C)


def gsau_reference(x, w1, b1, wdw, bdw, w2, b2, gamma, beta, scale):
    # Pure-JAX NHWC reference, identical math to the PyTorch module.
    N, H, W, C = x.shape
    mu = x.mean(-1, keepdims=True)
    var = ((x - mu) ** 2).mean(-1, keepdims=True)
    xn = (x - mu) / jnp.sqrt(var + EPS) * gamma[0] + beta[0]
    y = xn @ w1 + b1[0]
    a, v = y[..., :C], y[..., C:]
    ap = jnp.pad(a, ((0, 0), (PAD, PAD), (PAD, PAD), (0, 0)))
    acc = jnp.zeros_like(a)
    for t in range(KS * KS):
        dy, dx = t // KS, t % KS
        acc = acc + ap[:, dy:dy + H, dx:dx + W, :] * wdw[t]
    a_dw = acc + bdw[0]
    out = (v * a_dw) @ w2 + b2[0]
    return out * scale[0] + x


if __name__ == "__main__":
    # Small shapes: batch=2, n_feats=8, spatial 16x16  (W*C = 128 lanes).
    N, C, H, W = 2, 8, 16, 16

    key = jax.random.PRNGKey(0)
    keys = jax.random.split(key, 10)

    x = jax.random.normal(keys[0], (N, H, W, C), jnp.float32)

    # Parameters (deterministic synthetic init; shapes follow GSAU.__init__).
    w1 = 0.1 * jax.random.normal(keys[1], (C, 2 * C), jnp.float32)     # Conv1 (1x1): C -> 2C
    b1 = 0.1 * jax.random.normal(keys[2], (1, 2 * C), jnp.float32)
    wdw = 0.1 * jax.random.normal(keys[3], (KS * KS, C), jnp.float32)  # DWConv1 7x7 depthwise
    bdw = 0.1 * jax.random.normal(keys[4], (1, C), jnp.float32)
    w2 = 0.1 * jax.random.normal(keys[5], (C, C), jnp.float32)         # Conv2 (1x1): C -> C
    b2 = 0.1 * jax.random.normal(keys[6], (1, C), jnp.float32)
    # Non-trivial LayerNorm affine so the host-side gamma/beta folding is
    # actually exercised by the check.
    gamma = 1.0 + 0.1 * jax.random.normal(keys[7], (1, C), jnp.float32)
    beta = 0.1 * jax.random.normal(keys[8], (1, C), jnp.float32)
    # PyTorch inits `scale` to zeros (output would equal the shortcut); use a
    # nonzero deterministic value so the whole compute path is exercised.
    scale = 0.5 + 0.1 * jax.random.normal(keys[9], (1, C), jnp.float32)

    out = gsau_forward(x, w1, b1, wdw, bdw, w2, b2, gamma, beta, scale)
    out = jax.block_until_ready(out)

    ref = gsau_reference(x, w1, b1, wdw, bdw, w2, b2, gamma, beta, scale)
    np.testing.assert_allclose(np.asarray(out), np.asarray(ref), rtol=1e-4, atol=2e-4)

    print("KERNEL_OK")
</pallas_src>

<mosaic_0001>
module attributes {stable_mosaic.version = 11 : i64} {
  func.func @gsau_kernel(%arg0: memref<32x128xf32, #tpu.memory_space<vmem>>, %arg1: memref<128x128xf32, #tpu.memory_space<vmem>>, %arg2: memref<128x256xf32, #tpu.memory_space<vmem>>, %arg3: memref<1x256xf32, #tpu.memory_space<vmem>>, %arg4: memref<49x128xf32, #tpu.memory_space<vmem>>, %arg5: memref<32x256xf32, #tpu.memory_space<vmem>>, %arg6: memref<32x128xf32, #tpu.memory_space<vmem>>, %arg7: memref<128x128xf32, #tpu.memory_space<vmem>>, %arg8: memref<1x128xf32, #tpu.memory_space<vmem>>, %arg9: memref<32x128xf32, #tpu.memory_space<vmem>>, %arg10: memref<256x128xf32, #tpu.memory_space<vmem>>) attributes {dimension_semantics = [], scalar_prefetch = 0 : i64, scratch_operands = 1 : i64, tpu.core_type = #tpu.core_type<tc>} {
    %c0 = arith.constant 0 : index
    %c0_0 = arith.constant 0 : index
    %0 = vector.load %arg0[%c0, %c0_0] : memref<32x128xf32, #tpu.memory_space<vmem>>, vector<32x128xf32>
    %c0_1 = arith.constant 0 : index
    %c0_2 = arith.constant 0 : index
    %1 = vector.load %arg1[%c0_1, %c0_2] : memref<128x128xf32, #tpu.memory_space<vmem>>, vector<128x128xf32>
    %cst = arith.constant dense<0.000000e+00> : vector<32x128xf32>
    %2 = tpu.matmul %0, %1, %cst {dimension_numbers = #tpu.dot_dimension_numbers<[1], [0], [0], [1], [0, 0, 1, 1], [], []>} : vector<32x128xf32>, vector<128x128xf32>, vector<32x128xf32> -> vector<32x128xf32>
    %3 = arith.subf %0, %2 : vector<32x128xf32>
    %4 = arith.mulf %3, %3 : vector<32x128xf32>
    %cst_3 = arith.constant dense<0.000000e+00> : vector<32x128xf32>
    %5 = tpu.matmul %4, %1, %cst_3 {dimension_numbers = #tpu.dot_dimension_numbers<[1], [0], [0], [1], [0, 0, 1, 1], [], []>} : vector<32x128xf32>, vector<128x128xf32>, vector<32x128xf32> -> vector<32x128xf32>
    %cst_4 = arith.constant 9.99999997E-7 : f32
    %6 = vector.broadcast %cst_4 : f32 to vector<32x128xf32>
    %7 = arith.addf %5, %6 : vector<32x128xf32>
    %8 = math.rsqrt %7 : vector<32x128xf32>
    %9 = arith.mulf %3, %8 : vector<32x128xf32>
    %c0_5 = arith.constant 0 : index
    %c0_6 = arith.constant 0 : index
    %10 = vector.load %arg2[%c0_5, %c0_6] : memref<128x256xf32, #tpu.memory_space<vmem>>, vector<128x256xf32>
    %cst_7 = arith.constant dense<0.000000e+00> : vector<32x256xf32>
    %11 = tpu.matmul %9, %10, %cst_7 {dimension_numbers = #tpu.dot_dimension_numbers<[1], [0], [0], [1], [0, 0, 1, 1], [], []>} : vector<32x128xf32>, vector<128x256xf32>, vector<32x256xf32> -> vector<32x256xf32>
    %c0_8 = arith.constant 0 : index
    %c0_9 = arith.constant 0 : index
    %12 = vector.load %arg3[%c0_8, %c0_9] : memref<1x256xf32, #tpu.memory_space<vmem>>, vector<1x256xf32>
    %13 = vector.broadcast %12 : vector<1x256xf32> to vector<32x256xf32>
    %14 = arith.addf %11, %13 : vector<32x256xf32>
    %15 = vector.extract_strided_slice %14 {offsets = [0, 0], sizes = [32, 128], strides = [1, 1]} : vector<32x256xf32> to vector<32x128xf32>
    %16 = vector.extract_strided_slice %14 {offsets = [0, 128], sizes = [32, 128], strides = [1, 1]} : vector<32x256xf32> to vector<32x128xf32>
    %c24_i32 = arith.constant 24 : i32
    %17 = tpu.dynamic_rotate %15 by %c24_i32 dim 1 : vector<32x128xf32>, i32 -> vector<32x128xf32>
    %c16_i32 = arith.constant 16 : i32
    %18 = tpu.dynamic_rotate %15 by %c16_i32 dim 1 : vector<32x128xf32>, i32 -> vector<32x128xf32>
    %c8_i32 = arith.constant 8 : i32
    %19 = tpu.dynamic_rotate %15 by %c8_i32 dim 1 : vector<32x128xf32>, i32 -> vector<32x128xf32>
    %c120_i32 = arith.constant 120 : i32
    %20 = tpu.dynamic_rotate %15 by %c120_i32 dim 1 : vector<32x128xf32>, i32 -> vector<32x128xf32>
    %c112_i32 = arith.constant 112 : i32
    %21 = tpu.dynamic_rotate %15 by %c112_i32 dim 1 : vector<32x128xf32>, i32 -> vector<32x128xf32>
    %c104_i32 = arith.constant 104 : i32
    %22 = tpu.dynamic_rotate %15 by %c104_i32 dim 1 : vector<32x128xf32>, i32 -> vector<32x128xf32>
    %c0_10 = arith.constant 0 : index
    %c0_11 = arith.constant 0 : index
    %23 = vector.load %arg4[%c0_10, %c0_11] : memref<49x128xf32, #tpu.memory_space<vmem>>, vector<49x128xf32>
    %24 = vector.extract_strided_slice %23 {offsets = [0, 0], sizes = [1, 128], strides = [1, 1]} : vector<49x128xf32> to vector<1x128xf32>
    %25 = vector.shape_cast %24 : vector<1x128xf32> to vector<128xf32>
    %26 = vector.shape_cast %25 : vector<128xf32> to vector<1x128xf32>
    %27 = vector.broadcast %26 : vector<1x128xf32> to vector<32x128xf32>
    %28 = arith.mulf %17, %27 : vector<32x128xf32>
    %29 = vector.extract_strided_slice %23 {offsets = [1, 0], sizes = [1, 128], strides = [1, 1]} : vector<49x128xf32> to vector<1x128xf32>
    %30 = vector.shape_cast %29 : vector<1x128xf32> to vector<128xf32>
    %31 = vector.shape_cast %30 : vector<128xf32> to vector<1x128xf32>
    %32 = vector.broadcast %31 : vector<1x128xf32> to vector<32x128xf32>
    %33 = arith.mulf %18, %32 : vector<32x128xf32>
    %34 = arith.addf %28, %33 : vector<32x128xf32>
    %35 = vector.extract_strided_slice %23 {offsets = [2, 0], sizes = [1, 128], strides = [1, 1]} : vector<49x128xf32> to vector<1x128xf32>
    %36 = vector.shape_cast %35 : vector<1x128xf32> to vector<128xf32>
    %37 = vector.shape_cast %36 : vector<128xf32> to vector<1x128xf32>
    %38 = vector.broadcast %37 : vector<1x128xf32> to vector<32x128xf32>
    %39 = arith.mulf %19, %38 : vector<32x128xf32>
    %40 = arith.addf %34, %39 : vector<32x128xf32>
    %41 = vector.extract_strided_slice %23 {offsets = [3, 0], sizes = [1, 128], strides = [1, 1]} : vector<49x128xf32> to vector<1x128xf32>
    %42 = vector.shape_cast %41 : vector<1x128xf32> to vector<128xf32>
    %43 = vector.shape_cast %42 : vector<128xf32> to vector<1x128xf32>
    %44 = vector.broadcast %43 : vector<1x128xf32> to vector<32x128xf32>
    %45 = arith.mulf %15, %44 : vector<32x128xf32>
    %46 = arith.addf %40, %45 : vector<32x128xf32>
    %47 = vector.extract_strided_slice %23 {offsets = [4, 0], sizes = [1, 128], strides = [1, 1]} : vector<49x128xf32> to vector<1x128xf32>
    %48 = vector.shape_cast %47 : vector<1x128xf32> to vector<128xf32>
    %49 = vector.shape_cast %48 : vector<128xf32> to vector<1x128xf32>
    %50 = vector.broadcast %49 : vector<1x128xf32> to vector<32x128xf32>
    %51 = arith.mulf %20, %50 : vector<32x128xf32>
    %52 = arith.addf %46, %51 : vector<32x128xf32>
    %53 = vector.extract_strided_slice %23 {offsets = [5, 0], sizes = [1, 128], strides = [1, 1]} : vector<49x128xf32> to vector<1x128xf32>
    %54 = vector.shape_cast %53 : vector<1x128xf32> to vector<128xf32>
    %55 = vector.shape_cast %54 : vector<128xf32> to vector<1x128xf32>
    %56 = vector.broadcast %55 : vector<1x128xf32> to vector<32x128xf32>
    %57 = arith.mulf %21, %56 : vector<32x128xf32>
    %58 = arith.addf %52, %57 : vector<32x128xf32>
    %59 = vector.extract_strided_slice %23 {offsets = [6, 0], sizes = [1, 128], strides = [1, 1]} : vector<49x128xf32> to vector<1x128xf32>
    %60 = vector.shape_cast %59 : vector<1x128xf32> to vector<128xf32>
    %61 = vector.shape_cast %60 : vector<128xf32> to vector<1x128xf32>
    %62 = vector.broadcast %61 : vector<1x128xf32> to vector<32x128xf32>
    %63 = arith.mulf %22, %62 : vector<32x128xf32>
    %64 = arith.addf %58, %63 : vector<32x128xf32>
    %c0_12 = arith.constant 0 : index
    %c0_13 = arith.constant 0 : index
    %65 = vector.load %arg10[%c0_12, %c0_13] : memref<256x128xf32, #tpu.memory_space<vmem>>, vector<32x128xf32>
    tpu.vector_store %arg10[%c0_12, %c0_13], %64 {strides = array<i32>} : memref<256x128xf32, #tpu.memory_space<vmem>>, vector<32x128xf32>,
    %66 = vector.extract_strided_slice %23 {offsets = [7, 0], sizes = [1, 128], strides = [1, 1]} : vector<49x128xf32> to vector<1x128xf32>
    %67 = vector.shape_cast %66 : vector<1x128xf32> to vector<128xf32>
    %68 = vector.shape_cast %67 : vector<128xf32> to vector<1x128xf32>
    %69 = vector.broadcast %68 : vector<1x128xf32> to vector<32x128xf32>
    %70 = arith.mulf %17, %69 : vector<32x128xf32>
    %71 = vector.extract_strided_slice %23 {offsets = [8, 0], sizes = [1, 128], strides = [1, 1]} : vector<49x128xf32> to vector<1x128xf32>
    %72 = vector.shape_cast %71 : vector<1x128xf32> to vector<128xf32>
    %73 = vector.shape_cast %72 : vector<128xf32> to vector<1x128xf32>
    %74 = vector.broadcast %73 : vector<1x128xf32> to vector<32x128xf32>
    %75 = arith.mulf %18, %74 : vector<32x128xf32>
    %76 = arith.addf %70, %75 : vector<32x128xf32>
    %77 = vector.extract_strided_slice %23 {offsets = [9, 0], sizes = [1, 128], strides = [1, 1]} : vector<49x128xf32> to vector<1x128xf32>
    %78 = vector.shape_cast %77 : vector<1x128xf32> to vector<128xf32>
    %79 = vector.shape_cast %78 : vector<128xf32> to vector<1x128xf32>
    %80 = vector.broadcast %79 : vector<1x128xf32> to vector<32x128xf32>
    %81 = arith.mulf %19, %80 : vector<32x128xf32>
    %82 = arith.addf %76, %81 : vector<32x128xf32>
    %83 = vector.extract_strided_slice %23 {offsets = [10, 0], sizes = [1, 128], strides = [1, 1]} : vector<49x128xf32> to vector<1x128xf32>
    %84 = vector.shape_cast %83 : vector<1x128xf32> to vector<128xf32>
    %85 = vector.shape_cast %84 : vector<128xf32> to vector<1x128xf32>
    %86 = vector.broadcast %85 : vector<1x128xf32> to vector<32x128xf32>
    %87 = arith.mulf %15, %86 : vector<32x128xf32>
    %88 = arith.addf %82, %87 : vector<32x128xf32>
    %89 = vector.extract_strided_slice %23 {offsets = [11, 0], sizes = [1, 128], strides = [1, 1]} : vector<49x128xf32> to vector<1x128xf32>
    %90 = vector.shape_cast %89 : vector<1x128xf32> to vector<128xf32>
    %91 = vector.shape_cast %90 : vector<128xf32> to vector<1x128xf32>
    %92 = vector.broadcast %91 : vector<1x128xf32> to vector<32x128xf32>
    %93 = arith.mulf %20, %92 : vector<32x128xf32>
    %94 = arith.addf %88, %93 : vector<32x128xf32>
    %95 = vector.extract_strided_slice %23 {offsets = [12, 0], sizes = [1, 128], strides = [1, 1]} : vector<49x128xf32> to vector<1x128xf32>
    %96 = vector.shape_cast %95 : vector<1x128xf32> to vector<128xf32>
    %97 = vector.shape_cast %96 : vector<128xf32> to vector<1x128xf32>
    %98 = vector.broadcast %97 : vector<1x128xf32> to vector<32x128xf32>
    %99 = arith.mulf %21, %98 : vector<32x128xf32>
    %100 = arith.addf %94, %99 : vector<32x128xf32>
    %101 = vector.extract_strided_slice %23 {offsets = [13, 0], sizes = [1, 128], strides = [1, 1]} : vector<49x128xf32> to vector<1x128xf32>
    %102 = vector.shape_cast %101 : vector<1x128xf32> to vector<128xf32>
    %103 = vector.shape_cast %102 : vector<128xf32> to vector<1x128xf32>
    %104 = vector.broadcast %103 : vector<1x128xf32> to vector<32x128xf32>
    %105 = arith.mulf %22, %104 : vector<32x128xf32>
    %106 = arith.addf %100, %105 : vector<32x128xf32>
    %c32 = arith.constant 32 : index
    %c0_14 = arith.constant 0 : index
    %107 = vector.load %arg10[%c32, %c0_14] : memref<256x128xf32, #tpu.memory_space<vmem>>, vector<32x128xf32>
    tpu.vector_store %arg10[%c32, %c0_14], %106 {strides = array<i32>} : memref<256x128xf32, #tpu.memory_space<vmem>>, vector<32x128xf32>,
    %108 = vector.extract_strided_slice %23 {offsets = [14, 0], sizes = [1, 128], strides = [1, 1]} : vector<49x128xf32> to vector<1x128xf32>
    %109 = vector.shape_cast %108 : vector<1x128xf32> to vector<128xf32>
    %110 = vector.shape_cast %109 : vector<128xf32> to vector<1x128xf32>
    %111 = vector.broadcast %110 : vector<1x128xf32> to vector<32x128xf32>
    %112 = arith.mulf %17, %111 : vector<32x128xf32>
    %113 = vector.extract_strided_slice %23 {offsets = [15, 0], sizes = [1, 128], strides = [1, 1]} : vector<49x128xf32> to vector<1x128xf32>
    %114 = vector.shape_cast %113 : vector<1x128xf32> to vector<128xf32>
    %115 = vector.shape_cast %114 : vector<128xf32> to vector<1x128xf32>
    %116 = vector.broadcast %115 : vector<1x128xf32> to vector<32x128xf32>
    %117 = arith.mulf %18, %116 : vector<32x128xf32>
    %118 = arith.addf %112, %117 : vector<32x128xf32>
    %119 = vector.extract_strided_slice %23 {offsets = [16, 0], sizes = [1, 128], strides = [1, 1]} : vector<49x128xf32> to vector<1x128xf32>
    %120 = vector.shape_cast %119 : vector<1x128xf32> to vector<128xf32>
    %121 = vector.shape_cast %120 : vector<128xf32> to vector<1x128xf32>
    %122 = vector.broadcast %121 : vector<1x128xf32> to vector<32x128xf32>
    %123 = arith.mulf %19, %122 : vector<32x128xf32>
    %124 = arith.addf %118, %123 : vector<32x128xf32>
    %125 = vector.extract_strided_slice %23 {offsets = [17, 0], sizes = [1, 128], strides = [1, 1]} : vector<49x128xf32> to vector<1x128xf32>
    %126 = vector.shape_cast %125 : vector<1x128xf32> to vector<128xf32>
    %127 = vector.shape_cast %126 : vector<128xf32> to vector<1x128xf32>
    %128 = vector.broadcast %127 : vector<1x128xf32> to vector<32x128xf32>
    %129 = arith.mulf %15, %128 : vector<32x128xf32>
    %130 = arith.addf %124, %129 : vector<32x128xf32>
    %131 = vector.extract_strided_slice %23 {offsets = [18, 0], sizes = [1, 128], strides = [1, 1]} : vector<49x128xf32> to vector<1x128xf32>
    %132 = vector.shape_cast %131 : vector<1x128xf32> to vector<128xf32>
    %133 = vector.shape_cast %132 : vector<128xf32> to vector<1x128xf32>
    %134 = vector.broadcast %133 : vector<1x128xf32> to vector<32x128xf32>
    %135 = arith.mulf %20, %134 : vector<32x128xf32>
    %136 = arith.addf %130, %135 : vector<32x128xf32>
    %137 = vector.extract_strided_slice %23 {offsets = [19, 0], sizes = [1, 128], strides = [1, 1]} : vector<49x128xf32> to vector<1x128xf32>
    %138 = vector.shape_cast %137 : vector<1x128xf32> to vector<128xf32>
    %139 = vector.shape_cast %138 : vector<128xf32> to vector<1x128xf32>
    %140 = vector.broadcast %139 : vector<1x128xf32> to vector<32x128xf32>
    %141 = arith.mulf %21, %140 : vector<32x128xf32>
    %142 = arith.addf %136, %141 : vector<32x128xf32>
    %143 = vector.extract_strided_slice %23 {offsets = [20, 0], sizes = [1, 128], strides = [1, 1]} : vector<49x128xf32> to vector<1x128xf32>
    %144 = vector.shape_cast %143 : vector<1x128xf32> to vector<128xf32>
    %145 = vector.shape_cast %144 : vector<128xf32> to vector<1x128xf32>
    %146 = vector.broadcast %145 : vector<1x128xf32> to vector<32x128xf32>
    %147 = arith.mulf %22, %146 : vector<32x128xf32>
    %148 = arith.addf %142, %147 : vector<32x128xf32>
    %c64 = arith.constant 64 : index
    %c0_15 = arith.constant 0 : index
    %149 = vector.load %arg10[%c64, %c0_15] : memref<256x128xf32, #tpu.memory_space<vmem>>, vector<32x128xf32>
    tpu.vector_store %arg10[%c64, %c0_15], %148 {strides = array<i32>} : memref<256x128xf32, #tpu.memory_space<vmem>>, vector<32x128xf32>,
    %150 = vector.extract_strided_slice %23 {offsets = [21, 0], sizes = [1, 128], strides = [1, 1]} : vector<49x128xf32> to vector<1x128xf32>
    %151 = vector.shape_cast %150 : vector<1x128xf32> to vector<128xf32>
    %152 = vector.shape_cast %151 : vector<128xf32> to vector<1x128xf32>
    %153 = vector.broadcast %152 : vector<1x128xf32> to vector<32x128xf32>
    %154 = arith.mulf %17, %153 : vector<32x128xf32>
    %155 = vector.extract_strided_slice %23 {offsets = [22, 0], sizes = [1, 128], strides = [1, 1]} : vector<49x128xf32> to vector<1x128xf32>
    %156 = vector.shape_cast %155 : vector<1x128xf32> to vector<128xf32>
    %157 = vector.shape_cast %156 : vector<128xf32> to vector<1x128xf32>
    %158 = vector.broadcast %157 : vector<1x128xf32> to vector<32x128xf32>
    %159 = arith.mulf %18, %158 : vector<32x128xf32>
    %160 = arith.addf %154, %159 : vector<32x128xf32>
    %161 = vector.extract_strided_slice %23 {offsets = [23, 0], sizes = [1, 128], strides = [1, 1]} : vector<49x128xf32> to vector<1x128xf32>
    %162 = vector.shape_cast %161 : vector<1x128xf32> to vector<128xf32>
    %163 = vector.shape_cast %162 : vector<128xf32> to vector<1x128xf32>
    %164 = vector.broadcast %163 : vector<1x128xf32> to vector<32x128xf32>
    %165 = arith.mulf %19, %164 : vector<32x128xf32>
    %166 = arith.addf %160, %165 : vector<32x128xf32>
    %167 = vector.extract_strided_slice %23 {offsets = [24, 0], sizes = [1, 128], strides = [1, 1]} : vector<49x128xf32> to vector<1x128xf32>
    %168 = vector.shape_cast %167 : vector<1x128xf32> to vector<128xf32>
    %169 = vector.shape_cast %168 : vector<128xf32> to vector<1x128xf32>
    %170 = vector.broadcast %169 : vector<1x128xf32> to vector<32x128xf32>
    %171 = arith.mulf %15, %170 : vector<32x128xf32>
    %172 = arith.addf %166, %171 : vector<32x128xf32>
    %173 = vector.extract_strided_slice %23 {offsets = [25, 0], sizes = [1, 128], strides = [1, 1]} : vector<49x128xf32> to vector<1x128xf32>
    %174 = vector.shape_cast %173 : vector<1x128xf32> to vector<128xf32>
    %175 = vector.shape_cast %174 : vector<128xf32> to vector<1x128xf32>
    %176 = vector.broadcast %175 : vector<1x128xf32> to vector<32x128xf32>
    %177 = arith.mulf %20, %176 : vector<32x128xf32>
    %178 = arith.addf %172, %177 : vector<32x128xf32>
    %179 = vector.extract_strided_slice %23 {offsets = [26, 0], sizes = [1, 128], strides = [1, 1]} : vector<49x128xf32> to vector<1x128xf32>
    %180 = vector.shape_cast %179 : vector<1x128xf32> to vector<128xf32>
    %181 = vector.shape_cast %180 : vector<128xf32> to vector<1x128xf32>
    %182 = vector.broadcast %181 : vector<1x128xf32> to vector<32x128xf32>
    %183 = arith.mulf %21, %182 : vector<32x128xf32>
    %184 = arith.addf %178, %183 : vector<32x128xf32>
    %185 = vector.extract_strided_slice %23 {offsets = [27, 0], sizes = [1, 128], strides = [1, 1]} : vector<49x128xf32> to vector<1x128xf32>
    %186 = vector.shape_cast %185 : vector<1x128xf32> to vector<128xf32>
    %187 = vector.shape_cast %186 : vector<128xf32> to vector<1x128xf32>
    %188 = vector.broadcast %187 : vector<1x128xf32> to vector<32x128xf32>
    %189 = arith.mulf %22, %188 : vector<32x128xf32>
    %190 = arith.addf %184, %189 : vector<32x128xf32>
    %c96 = arith.constant 96 : index
    %c0_16 = arith.constant 0 : index
    %191 = vector.load %arg10[%c96, %c0_16] : memref<256x128xf32, #tpu.memory_space<vmem>>, vector<32x128xf32>
    tpu.vector_store %arg10[%c96, %c0_16], %190 {strides = array<i32>} : memref<256x128xf32, #tpu.memory_space<vmem>>, vector<32x128xf32>,
    %192 = vector.extract_strided_slice %23 {offsets = [28, 0], sizes = [1, 128], strides = [1, 1]} : vector<49x128xf32> to vector<1x128xf32>
    %193 = vector.shape_cast %192 : vector<1x128xf32> to vector<128xf32>
    %194 = vector.shape_cast %193 : vector<128xf32> to vector<1x128xf32>
    %195 = vector.broadcast %194 : vector<1x128xf32> to vector<32x128xf32>
    %196 = arith.mulf %17, %195 : vector<32x128xf32>
    %197 = vector.extract_strided_slice %23 {offsets = [29, 0], sizes = [1, 128], strides = [1, 1]} : vector<49x128xf32> to vector<1x128xf32>
    %198 = vector.shape_cast %197 : vector<1x128xf32> to vector<128xf32>
    %199 = vector.shape_cast %198 : vector<128xf32> to vector<1x128xf32>
    %200 = vector.broadcast %199 : vector<1x128xf32> to vector<32x128xf32>
    %201 = arith.mulf %18, %200 : vector<32x128xf32>
    %202 = arith.addf %196, %201 : vector<32x128xf32>
    %203 = vector.extract_strided_slice %23 {offsets = [30, 0], sizes = [1, 128], strides = [1, 1]} : vector<49x128xf32> to vector<1x128xf32>
    %204 = vector.shape_cast %203 : vector<1x128xf32> to vector<128xf32>
    %205 = vector.shape_cast %204 : vector<128xf32> to vector<1x128xf32>
    %206 = vector.broadcast %205 : vector<1x128xf32> to vector<32x128xf32>
    %207 = arith.mulf %19, %206 : vector<32x128xf32>
    %208 = arith.addf %202, %207 : vector<32x128xf32>
    %209 = vector.extract_strided_slice %23 {offsets = [31, 0], sizes = [1, 128], strides = [1, 1]} : vector<49x128xf32> to vector<1x128xf32>
    %210 = vector.shape_cast %209 : vector<1x128xf32> to vector<128xf32>
    %211 = vector.shape_cast %210 : vector<128xf32> to vector<1x128xf32>
    %212 = vector.broadcast %211 : vector<1x128xf32> to vector<32x128xf32>
    %213 = arith.mulf %15, %212 : vector<32x128xf32>
    %214 = arith.addf %208, %213 : vector<32x128xf32>
    %215 = vector.extract_strided_slice %23 {offsets = [32, 0], sizes = [1, 128], strides = [1, 1]} : vector<49x128xf32> to vector<1x128xf32>
    %216 = vector.shape_cast %215 : vector<1x128xf32> to vector<128xf32>
    %217 = vector.shape_cast %216 : vector<128xf32> to vector<1x128xf32>
    %218 = vector.broadcast %217 : vector<1x128xf32> to vector<32x128xf32>
    %219 = arith.mulf %20, %218 : vector<32x128xf32>
    %220 = arith.addf %214, %219 : vector<32x128xf32>
    %221 = vector.extract_strided_slice %23 {offsets = [33, 0], sizes = [1, 128], strides = [1, 1]} : vector<49x128xf32> to vector<1x128xf32>
    %222 = vector.shape_cast %221 : vector<1x128xf32> to vector<128xf32>
    %223 = vector.shape_cast %222 : vector<128xf32> to vector<1x128xf32>
    %224 = vector.broadcast %223 : vector<1x128xf32> to vector<32x128xf32>
    %225 = arith.mulf %21, %224 : vector<32x128xf32>
    %226 = arith.addf %220, %225 : vector<32x128xf32>
    %227 = vector.extract_strided_slice %23 {offsets = [34, 0], sizes = [1, 128], strides = [1, 1]} : vector<49x128xf32> to vector<1x128xf32>
    %228 = vector.shape_cast %227 : vector<1x128xf32> to vector<128xf32>
    %229 = vector.shape_cast %228 : vector<128xf32> to vector<1x128xf32>
    %230 = vector.broadcast %229 : vector<1x128xf32> to vector<32x128xf32>
    %231 = arith.mulf %22, %230 : vector<32x128xf32>
    %232 = arith.addf %226, %231 : vector<32x128xf32>
    %c128 = arith.constant 128 : index
    %c0_17 = arith.constant 0 : index
    %233 = vector.load %arg10[%c128, %c0_17] : memref<256x128xf32, #tpu.memory_space<vmem>>, vector<32x128xf32>
    tpu.vector_store %arg10[%c128, %c0_17], %232 {strides = array<i32>} : memref<256x128xf32, #tpu.memory_space<vmem>>, vector<32x128xf32>,
    %234 = vector.extract_strided_slice %23 {offsets = [35, 0], sizes = [1, 128], strides = [1, 1]} : vector<49x128xf32> to vector<1x128xf32>
    %235 = vector.shape_cast %234 : vector<1x128xf32> to vector<128xf32>
    %236 = vector.shape_cast %235 : vector<128xf32> to vector<1x128xf32>
    %237 = vector.broadcast %236 : vector<1x128xf32> to vector<32x128xf32>
    %238 = arith.mulf %17, %237 : vector<32x128xf32>
    %239 = vector.extract_strided_slice %23 {offsets = [36, 0], sizes = [1, 128], strides = [1, 1]} : vector<49x128xf32> to vector<1x128xf32>
    %240 = vector.shape_cast %239 : vector<1x128xf32> to vector<128xf32>
    %241 = vector.shape_cast %240 : vector<128xf32> to vector<1x128xf32>
    %242 = vector.broadcast %241 : vector<1x128xf32> to vector<32x128xf32>
    %243 = arith.mulf %18, %242 : vector<32x128xf32>
    %244 = arith.addf %238, %243 : vector<32x128xf32>
    %245 = vector.extract_strided_slice %23 {offsets = [37, 0], sizes = [1, 128], strides = [1, 1]} : vector<49x128xf32> to vector<1x128xf32>
    %246 = vector.shape_cast %245 : vector<1x128xf32> to vector<128xf32>
    %247 = vector.shape_cast %246 : vector<128xf32> to vector<1x128xf32>
    %248 = vector.broadcast %247 : vector<1x128xf32> to vector<32x128xf32>
    %249 = arith.mulf %19, %248 : vector<32x128xf32>
    %250 = arith.addf %244, %249 : vector<32x128xf32>
    %251 = vector.extract_strided_slice %23 {offsets = [38, 0], sizes = [1, 128], strides = [1, 1]} : vector<49x128xf32> to vector<1x128xf32>
    %252 = vector.shape_cast %251 : vector<1x128xf32> to vector<128xf32>
    %253 = vector.shape_cast %252 : vector<128xf32> to vector<1x128xf32>
    %254 = vector.broadcast %253 : vector<1x128xf32> to vector<32x128xf32>
    %255 = arith.mulf %15, %254 : vector<32x128xf32>
    %256 = arith.addf %250, %255 : vector<32x128xf32>
    %257 = vector.extract_strided_slice %23 {offsets = [39, 0], sizes = [1, 128], strides = [1, 1]} : vector<49x128xf32> to vector<1x128xf32>
    %258 = vector.shape_cast %257 : vector<1x128xf32> to vector<128xf32>
    %259 = vector.shape_cast %258 : vector<128xf32> to vector<1x128xf32>
    %260 = vector.broadcast %259 : vector<1x128xf32> to vector<32x128xf32>
    %261 = arith.mulf %20, %260 : vector<32x128xf32>
    %262 = arith.addf %256, %261 : vector<32x128xf32>
    %263 = vector.extract_strided_slice %23 {offsets = [40, 0], sizes = [1, 128], strides = [1, 1]} : vector<49x128xf32> to vector<1x128xf32>
    %264 = vector.shape_cast %263 : vector<1x128xf32> to vector<128xf32>
    %265 = vector.shape_cast %264 : vector<128xf32> to vector<1x128xf32>
    %266 = vector.broadcast %265 : vector<1x128xf32> to vector<32x128xf32>
    %267 = arith.mulf %21, %266 : vector<32x128xf32>
    %268 = arith.addf %262, %267 : vector<32x128xf32>
    %269 = vector.extract_strided_slice %23 {offsets = [41, 0], sizes = [1, 128], strides = [1, 1]} : vector<49x128xf32> to vector<1x128xf32>
    %270 = vector.shape_cast %269 : vector<1x128xf32> to vector<128xf32>
    %271 = vector.shape_cast %270 : vector<128xf32> to vector<1x128xf32>
    %272 = vector.broadcast %271 : vector<1x128xf32> to vector<32x128xf32>
    %273 = arith.mulf %22, %272 : vector<32x128xf32>
    %274 = arith.addf %268, %273 : vector<32x128xf32>
    %c160 = arith.constant 160 : index
    %c0_18 = arith.constant 0 : index
    %275 = vector.load %arg10[%c160, %c0_18] : memref<256x128xf32, #tpu.memory_space<vmem>>, vector<32x128xf32>
    tpu.vector_store %arg10[%c160, %c0_18], %274 {strides = array<i32>} : memref<256x128xf32, #tpu.memory_space<vmem>>, vector<32x128xf32>,
    %276 = vector.extract_strided_slice %23 {offsets = [42, 0], sizes = [1, 128], strides = [1, 1]} : vector<49x128xf32> to vector<1x128xf32>
    %277 = vector.shape_cast %276 : vector<1x128xf32> to vector<128xf32>
    %278 = vector.shape_cast %277 : vector<128xf32> to vector<1x128xf32>
    %279 = vector.broadcast %278 : vector<1x128xf32> to vector<32x128xf32>
    %280 = arith.mulf %17, %279 : vector<32x128xf32>
    %281 = vector.extract_strided_slice %23 {offsets = [43, 0], sizes = [1, 128], strides = [1, 1]} : vector<49x128xf32> to vector<1x128xf32>
    %282 = vector.shape_cast %281 : vector<1x128xf32> to vector<128xf32>
    %283 = vector.shape_cast %282 : vector<128xf32> to vector<1x128xf32>
    %284 = vector.broadcast %283 : vector<1x128xf32> to vector<32x128xf32>
    %285 = arith.mulf %18, %284 : vector<32x128xf32>
    %286 = arith.addf %280, %285 : vector<32x128xf32>
    %287 = vector.extract_strided_slice %23 {offsets = [44, 0], sizes = [1, 128], strides = [1, 1]} : vector<49x128xf32> to vector<1x128xf32>
    %288 = vector.shape_cast %287 : vector<1x128xf32> to vector<128xf32>
    %289 = vector.shape_cast %288 : vector<128xf32> to vector<1x128xf32>
    %290 = vector.broadcast %289 : vector<1x128xf32> to vector<32x128xf32>
    %291 = arith.mulf %19, %290 : vector<32x128xf32>
    %292 = arith.addf %286, %291 : vector<32x128xf32>
    %293 = vector.extract_strided_slice %23 {offsets = [45, 0], sizes = [1, 128], strides = [1, 1]} : vector<49x128xf32> to vector<1x128xf32>
    %294 = vector.shape_cast %293 : vector<1x128xf32> to vector<128xf32>
    %295 = vector.shape_cast %294 : vector<128xf32> to vector<1x128xf32>
    %296 = vector.broadcast %295 : vector<1x128xf32> to vector<32x128xf32>
    %297 = arith.mulf %15, %296 : vector<32x128xf32>
    %298 = arith.addf %292, %297 : vector<32x128xf32>
    %299 = vector.extract_strided_slice %23 {offsets = [46, 0], sizes = [1, 128], strides = [1, 1]} : vector<49x128xf32> to vector<1x128xf32>
    %300 = vector.shape_cast %299 : vector<1x128xf32> to vector<128xf32>
    %301 = vector.shape_cast %300 : vector<128xf32> to vector<1x128xf32>
    %302 = vector.broadcast %301 : vector<1x128xf32> to vector<32x128xf32>
    %303 = arith.mulf %20, %302 : vector<32x128xf32>
    %304 = arith.addf %298, %303 : vector<32x128xf32>
    %305 = vector.extract_strided_slice %23 {offsets = [47, 0], sizes = [1, 128], strides = [1, 1]} : vector<49x128xf32> to vector<1x128xf32>
    %306 = vector.shape_cast %305 : vector<1x128xf32> to vector<128xf32>
    %307 = vector.shape_cast %306 : vector<128xf32> to vector<1x128xf32>
    %308 = vector.broadcast %307 : vector<1x128xf32> to vector<32x128xf32>
    %309 = arith.mulf %21, %308 : vector<32x128xf32>
    %310 = arith.addf %304, %309 : vector<32x128xf32>
    %311 = vector.extract_strided_slice %23 {offsets = [48, 0], sizes = [1, 128], strides = [1, 1]} : vector<49x128xf32> to vector<1x128xf32>
    %312 = vector.shape_cast %311 : vector<1x128xf32> to vector<128xf32>
    %313 = vector.shape_cast %312 : vector<128xf32> to vector<1x128xf32>
    %314 = vector.broadcast %313 : vector<1x128xf32> to vector<32x128xf32>
    %315 = arith.mulf %22, %314 : vector<32x128xf32>
    %316 = arith.addf %310, %315 : vector<32x128xf32>
    %c192 = arith.constant 192 : index
    %c0_19 = arith.constant 0 : index
    %317 = vector.load %arg10[%c192, %c0_19] : memref<256x128xf32, #tpu.memory_space<vmem>>, vector<32x128xf32>
    tpu.vector_store %arg10[%c192, %c0_19], %316 {strides = array<i32>} : memref<256x128xf32, #tpu.memory_space<vmem>>, vector<32x128xf32>,
    %c0_20 = arith.constant 0 : index
    %c0_21 = arith.constant 0 : index
    %318 = vector.load %arg6[%c0_20, %c0_21] : memref<32x128xf32, #tpu.memory_space<vmem>>, vector<32x128xf32>
    %c224 = arith.constant 224 : index
    %c0_22 = arith.constant 0 : index
    %319 = vector.load %arg10[%c224, %c0_22] : memref<256x128xf32, #tpu.memory_space<vmem>>, vector<32x128xf32>
    tpu.vector_store %arg10[%c224, %c0_22], %318 {strides = array<i32>} : memref<256x128xf32, #tpu.memory_space<vmem>>, vector<32x128xf32>,
    %c0_23 = arith.constant 0 : index
    %c0_24 = arith.constant 0 : index
    %320 = vector.load %arg5[%c0_23, %c0_24] : memref<32x256xf32, #tpu.memory_space<vmem>>, vector<32x256xf32>
    %c0_25 = arith.constant 0 : index
    %c0_26 = arith.constant 0 : index
    %321 = vector.load %arg10[%c0_25, %c0_26] : memref<256x128xf32, #tpu.memory_space<vmem>>, vector<256x128xf32>
    %cst_27 = arith.constant dense<0.000000e+00> : vector<32x128xf32>
    %322 = tpu.matmul %320, %321, %cst_27 {dimension_numbers = #tpu.dot_dimension_numbers<[1], [0], [0], [1], [0, 0, 1, 1], [], []>} : vector<32x256xf32>, vector<256x128xf32>, vector<32x128xf32> -> vector<32x128xf32>
    %323 = arith.mulf %16, %322 : vector<32x128xf32>
    %c0_28 = arith.constant 0 : index
    %c0_29 = arith.constant 0 : index
    %324 = vector.load %arg7[%c0_28, %c0_29] : memref<128x128xf32, #tpu.memory_space<vmem>>, vector<128x128xf32>
    %cst_30 = arith.constant dense<0.000000e+00> : vector<32x128xf32>
    %325 = tpu.matmul %323, %324, %cst_30 {dimension_numbers = #tpu.dot_dimension_numbers<[1], [0], [0], [1], [0, 0, 1, 1], [], []>} : vector<32x128xf32>, vector<128x128xf32>, vector<32x128xf32> -> vector<32x128xf32>
    %c0_31 = arith.constant 0 : index
    %c0_32 = arith.constant 0 : index
    %326 = vector.load %arg8[%c0_31, %c0_32] : memref<1x128xf32, #tpu.memory_space<vmem>>, vector<1x128xf32>
    %327 = vector.broadcast %326 : vector<1x128xf32> to vector<32x128xf32>
    %328 = arith.addf %325, %327 : vector<32x128xf32>
    %c0_33 = arith.constant 0 : index
    %c0_34 = arith.constant 0 : index
    %329 = vector.load %arg0[%c0_33, %c0_34] : memref<32x128xf32, #tpu.memory_space<vmem>>, vector<32x128xf32>
    %330 = arith.addf %328, %329 : vector<32x128xf32>
    %c0_35 = arith.constant 0 : index
    %c0_36 = arith.constant 0 : index
    %331 = vector.load %arg9[%c0_35, %c0_36] : memref<32x128xf32, #tpu.memory_space<vmem>>, vector<32x128xf32>
    tpu.vector_store %arg9[%c0_35, %c0_36], %330 {strides = array<i32>} : memref<32x128xf32, #tpu.memory_space<vmem>>, vector<32x128xf32>,
    return
  }
}

</mosaic_0001>

<llo_original>
// kernel: tile.27
$region0: #{tile.27}
  #allocation0 [shape = 's32[1]{0}', space=sflag, size = 0x4, scoped, tag = 'scoped memory for tile.27']
  %s0 = inlined_call_operand.vmem [shape: f32[8], index: 0, kind: input, shape index: {}]
  %s1 = inlined_call_operand.vmem [shape: f32[16,8], index: 1, kind: output, shape index: {}]
  // Predicated region
  $region2: #{tile.27} parent=0 // pred_check
    _
  $region3: #{tile.27} parent=0 // pred_check_branch
    %3 = sbr.rel (0) target = $region5
  $region4: #{tile.27} parent=0 // pred_region
    _
  $region5: #{tile.27} parent=0 // pred_fallthru
    _
  %v4 = vld [vmem:[%s0] ss:$0 sm:$0xff]
  %5 = vst [vmem:[%s1] sm:$0xff] %v4
  %s6 = scalar_lea.vmem %s1, 8
  %7 = vst [vmem:[%s6] sm:$0xff] %v4

// kernel: tile.28
$region0: #{tile.28}
  %s0 = inlined_call_operand.vmem [shape: f32[16,8], index: 0, kind: input, shape index: {}]
  %s1 = inlined_call_operand.vmem [shape: f32[1,128], index: 1, kind: output, shape index: {}]
  $region1: #{tile.28} parent=0
    #allocation0 [shape = 'u8[4096]{0}', space=vmem, size = 0x1000, scoped, tag = 'scoped mem for output reshape']
    %v2 = vld [vmem:[%s0] sm:$0x1]
    %vm3 = vcmask 64512
    %4 = vst.msk [vmem:[#allocation0] sm:$0x1] %vm3, %v2
    %s5 = scalar_lea.vmem %s0, 15
    %v6 = vld [vmem:[%s5] sm:$0x1]
    %7 = vrot.lane.b32.xlu0 %v6, 120
    %v8 = vpop.permute.xlu0 %7
    %vm9 = vcmask 1048512
    %10 = vst.msk [vmem:[#allocation0] sm:$0x1] %vm9, %v8
    %s11 = scalar_lea.vmem %s0, 14
    %v12 = vld [vmem:[%s11] sm:$0x1]
    %13 = vrot.lane.b32.xlu0 %v12, 112
    %v14 = vpop.permute.xlu0 %13
    %vm15 = vcmask 982912
    %16 = vst.msk [vmem:[#allocation0] sm:$0x1] %vm15, %v14
    %s17 = scalar_lea.vmem %s0, 13
    %v18 = vld [vmem:[%s17] sm:$0x1]
    %19 = vrot.lane.b32.xlu0 %v18, 104
    %v20 = vpop.permute.xlu0 %19
    %vm21 = vcmask 917312
    %22 = vst.msk [vmem:[#allocation0] sm:$0x1] %vm21, %v20
    %s23 = scalar_lea.vmem %s0, 12
    %v24 = vld [vmem:[%s23] sm:$0x1]
    %25 = vrot.lane.b32.xlu0 %v24, 96
    %v26 = vpop.permute.xlu0 %25
    %vm27 = vcmask 851712
    %28 = vst.msk [vmem:[#allocation0] sm:$0x1] %vm27, %v26
    %s29 = scalar_lea.vmem %s0, 11
    %v30 = vld [vmem:[%s29] sm:$0x1]
    %31 = vrot.lane.b32.xlu0 %v30, 88
    %v32 = vpop.permute.xlu0 %31
    %vm33 = vcmask 786112
    %34 = vst.msk [vmem:[#allocation0] sm:$0x1] %vm33, %v32
    %s35 = scalar_lea.vmem %s0, 10
    %v36 = vld [vmem:[%s35] sm:$0x1]
    %37 = vrot.lane.b32.xlu0 %v36, 80
    %v38 = vpop.permute.xlu0 %37
    %vm39 = vcmask 720512
    %40 = vst.msk [vmem:[#allocation0] sm:$0x1] %vm39, %v38
    %s41 = scalar_lea.vmem %s0, 9
    %v42 = vld [vmem:[%s41] sm:$0x1]
    %43 = vrot.lane.b32.xlu0 %v42, 72
    %v44 = vpop.permute.xlu0 %43
    %vm45 = vcmask 654912
    %46 = vst.msk [vmem:[#allocation0] sm:$0x1] %vm45, %v44
    %s47 = scalar_lea.vmem %s0, 8
    %v48 = vld [vmem:[%s47] sm:$0x1]
    %49 = vrot.lane.b32.xlu0 %v48, 64
    %v50 = vpop.permute.xlu0 %49
    %vm51 = vcmask 589312
    %52 = vst.msk [vmem:[#allocation0] sm:$0x1] %vm51, %v50
    %s53 = scalar_lea.vmem %s0, 7
    %v54 = vld [vmem:[%s53] sm:$0x1]
    %55 = vrot.lane.b32.xlu0 %v54, 56
    %v56 = vpop.permute.xlu0 %55
    %vm57 = vcmask 523712
    %58 = vst.msk [vmem:[#allocation0] sm:$0x1] %vm57, %v56
    %s59 = scalar_lea.vmem %s0, 6
    %v60 = vld [vmem:[%s59] sm:$0x1]
    %61 = vrot.lane.b32.xlu0 %v60, 48
    %v62 = vpop.permute.xlu0 %61
    %vm63 = vcmask 458112
    %64 = vst.msk [vmem:[#allocation0] sm:$0x1] %vm63, %v62
    %s65 = scalar_lea.vmem %s0, 5
    %v66 = vld [vmem:[%s65] sm:$0x1]
    %67 = vrot.lane.b32.xlu0 %v66, 40
    %v68 = vpop.permute.xlu0 %67
    %vm69 = vcmask 392512
    %70 = vst.msk [vmem:[#allocation0] sm:$0x1] %vm69, %v68
    %s71 = scalar_lea.vmem %s0, 4
    %v72 = vld [vmem:[%s71] sm:$0x1]
    %73 = vrot.lane.b32.xlu0 %v72, 32
    %v74 = vpop.permute.xlu0 %73
    %vm75 = vcmask 326912
    %76 = vst.msk [vmem:[#allocation0] sm:$0x1] %vm75, %v74
    %s77 = scalar_lea.vmem %s0, 3
    %v78 = vld [vmem:[%s77] sm:$0x1]
    %79 = vrot.lane.b32.xlu0 %v78, 24
    %v80 = vpop.permute.xlu0 %79
    %vm81 = vcmask 261312
    %82 = vst.msk [vmem:[#allocation0] sm:$0x1] %vm81, %v80
    %s83 = scalar_lea.vmem %s0, 2
    %v84 = vld [vmem:[%s83] sm:$0x1]
    %85 = vrot.lane.b32.xlu0 %v84, 16
    %v86 = vpop.permute.xlu0 %85
    %vm87 = vcmask 195712
    %88 = vst.msk [vmem:[#allocation0] sm:$0x1] %vm87, %v86
    %s89 = scalar_lea.vmem %s0, 1
    %v90 = vld [vmem:[%s89] sm:$0x1]
    %91 = vrot.lane.b32.xlu0 %v90, 8
    %v92 = vpop.permute.xlu0 %91
    %vm93 = vcmask 130112
    %94 = vst.msk [vmem:[#allocation0] sm:$0x1] %vm93, %v92
    %s96 = sshllo.u32 0, 1
    %v98 = vld [vmem:[#allocation0] sm:%s96]
    %s99 = sshllo.u32 0, 1
    %100 = vst [vmem:[%s1] sm:%s99] %v98

// kernel: gsau_forward.1
$region0: #{gsau_forward.1}
  #allocation0 [shape = 'u32[]', space=smem, size = 0x4, offset = 0x4, fixed_abs, tag = 'smem constant byte address 0x4 - core index']
  #allocation1 [shape = 'u32[144,128]{1,0:T(1,128)}', space=vmem, size = 0x12000, scoped, tag = 'internal scratch']
  #allocation2 [shape = 'f32[256,128]{1,0:T(8,128)}', space=vmem, size = 0x20000, scoped, tag = 'scratch operand']
  %s0 = inlined_call_operand.vmem [shape: f32[32,128], index: 0, kind: input, shape index: {}]
  %s1 = inlined_call_operand.vmem [shape: f32[128,128], index: 1, kind: input, shape index: {}]
  %s2 = inlined_call_operand.vmem [shape: f32[128,256], index: 2, kind: input, shape index: {}]
  %s3 = inlined_call_operand.vmem [shape: f32[1,256], index: 3, kind: input, shape index: {}]
  %s4 = inlined_call_operand.vmem [shape: f32[49,128], index: 4, kind: input, shape index: {}]
  %s5 = inlined_call_operand.vmem [shape: f32[32,256], index: 5, kind: input, shape index: {}]
  %s6 = inlined_call_operand.vmem [shape: f32[32,128], index: 6, kind: input, shape index: {}]
  %s7 = inlined_call_operand.vmem [shape: f32[128,128], index: 7, kind: input, shape index: {}]
  %s8 = inlined_call_operand.vmem [shape: f32[1,128], index: 8, kind: input, shape index: {}]
  %s9 = inlined_call_operand.vmem [shape: f32[32,128], index: 9, kind: output, shape index: {}]
  %s10 = sld [smem:[#allocation0]]
  $region46: #{gsau_forward.1} parent=0
    _
  %s12 = ssub.s32 1, %s10
  %s13 = scalar_select 0, %s12, %s10
  // Predicated region
  $region2: #{gsau_forward.1} parent=0 // pred_check
    _
  $region3: #{gsau_forward.1} parent=0 // pred_check_branch
    %15 = sbr.rel (0) target = $region5
  $region4: #{gsau_forward.1} parent=0 // pred_region
    _
  $region5: #{gsau_forward.1} parent=0 // pred_fallthru
    _
  // Predicated region
  $region6: #{gsau_forward.1} parent=0 // pred_check
    _
  $region7: #{gsau_forward.1} parent=0 // pred_check_branch
    %17 = sbr.rel (0) target = $region9
  $region8: #{gsau_forward.1} parent=0 // pred_region
    _
  $region9: #{gsau_forward.1} parent=0 // pred_fallthru
    _
  // Predicated region
  $region10: #{gsau_forward.1} parent=0 // pred_check
    _
  $region11: #{gsau_forward.1} parent=0 // pred_check_branch
    %19 = sbr.rel (0) target = $region13
  $region12: #{gsau_forward.1} parent=0 // pred_region
    _
  $region13: #{gsau_forward.1} parent=0 // pred_fallthru
    _
  // Predicated region
  $region14: #{gsau_forward.1} parent=0 // pred_check
    _
  $region15: #{gsau_forward.1} parent=0 // pred_check_branch
    %21 = sbr.rel (0) target = $region17
  $region16: #{gsau_forward.1} parent=0 // pred_region
    _
  $region17: #{gsau_forward.1} parent=0 // pred_fallthru
    _
  // Predicated region
  $region18: #{gsau_forward.1} parent=0 // pred_check
    _
  $region19: #{gsau_forward.1} parent=0 // pred_check_branch
    %23 = sbr.rel (0) target = $region21
  $region20: #{gsau_forward.1} parent=0 // pred_region
    _
  $region21: #{gsau_forward.1} parent=0 // pred_fallthru
    _
  // Predicated region
  $region22: #{gsau_forward.1} parent=0 // pred_check
    _
  $region23: #{gsau_forward.1} parent=0 // pred_check_branch
    %25 = sbr.rel (0) target = $region25
  $region24: #{gsau_forward.1} parent=0 // pred_region
    _
  $region25: #{gsau_forward.1} parent=0 // pred_fallthru
    _
  // Predicated region
  $region26: #{gsau_forward.1} parent=0 // pred_check
    _
  $region27: #{gsau_forward.1} parent=0 // pred_check_branch
    %27 = sbr.rel (0) target = $region29
  $region28: #{gsau_forward.1} parent=0 // pred_region
    _
  $region29: #{gsau_forward.1} parent=0 // pred_fallthru
    _
  // Predicated region
  $region30: #{gsau_forward.1} parent=0 // pred_check
    _
  $region31: #{gsau_forward.1} parent=0 // pred_check_branch
    %29 = sbr.rel (0) target = $region33
  $region32: #{gsau_forward.1} parent=0 // pred_region
    _
  $region33: #{gsau_forward.1} parent=0 // pred_fallthru
    _
  // Predicated region
  $region34: #{gsau_forward.1} parent=0 // pred_check
    _
  $region35: #{gsau_forward.1} parent=0 // pred_check_branch
    %31 = sbr.rel (0) target = $region37
  $region36: #{gsau_forward.1} parent=0 // pred_region
    _
  $region37: #{gsau_forward.1} parent=0 // pred_fallthru
    _
  %v32 = vld [vmem:[%s0] sm:$0xff]
  %v33 = vld [vmem:[%s0 + $0x8] sm:$0xff]
  %v34 = vld [vmem:[%s0 + $0x10] sm:$0xff]
  %v35 = vld [vmem:[%s0 + $0x18] sm:$0xff]
  %v36 = vld [vmem:[%s1] sm:$0xff]
  %v37 = vld [vmem:[%s1 + $0x8] sm:$0xff]
  %v38 = vld [vmem:[%s1 + $0x10] sm:$0xff]
  %v39 = vld [vmem:[%s1 + $0x18] sm:$0xff]
  %v40 = vld [vmem:[%s1 + $0x20] sm:$0xff]
  %v41 = vld [vmem:[%s1 + $0x28] sm:$0xff]
  %v42 = vld [vmem:[%s1 + $0x30] sm:$0xff]
  %v43 = vld [vmem:[%s1 + $0x38] sm:$0xff]
  %v44 = vld [vmem:[%s1 + $0x40] sm:$0xff]
  %v45 = vld [vmem:[%s1 + $0x48] sm:$0xff]
  %v46 = vld [vmem:[%s1 + $0x50] sm:$0xff]
  %v47 = vld [vmem:[%s1 + $0x58] sm:$0xff]
  %v48 = vld [vmem:[%s1 + $0x60] sm:$0xff]
  %v49 = vld [vmem:[%s1 + $0x68] sm:$0xff]
  %v50 = vld [vmem:[%s1 + $0x70] sm:$0xff]
  %v51 = vld [vmem:[%s1 + $0x78] sm:$0xff]
  %52 = vmatprep.subr.mxu0 0.0
  %53 = vmatpush1.msra.mxu0 %v36
  %54 = vmatprep.subr.mxu0 0.0
  %55 = vmatpush1.msra.mxu0 %v37
  %56 = vmatprep.subr.mxu0 0.0
  %57 = vmatpush1.msra.mxu0 %v38
  %58 = vmatprep.subr.mxu0 0.0
  %59 = vmatpush1.msra.mxu0 %v39
  %60 = vmatprep.subr.mxu0 0.0
  %61 = vmatpush1.msra.mxu0 %v40
  %62 = vmatprep.subr.mxu0 0.0
  %63 = vmatpush1.msra.mxu0 %v41
  %64 = vmatprep.subr.mxu0 0.0
  %65 = vmatpush1.msra.mxu0 %v42
  %66 = vmatprep.subr.mxu0 0.0
  %67 = vmatpush1.msra.mxu0 %v43
  %68 = vmatprep.subr.mxu0 0.0
  %69 = vmatpush1.msra.mxu0 %v44
  %70 = vmatprep.subr.mxu0 0.0
  %71 = vmatpush1.msra.mxu0 %v45
  %72 = vmatprep.subr.mxu0 0.0
  %73 = vmatpush1.msra.mxu0 %v46
  %74 = vmatprep.subr.mxu0 0.0
  %75 = vmatpush1.msra.mxu0 %v47
  %76 = vmatprep.subr.mxu0 0.0
  %77 = vmatpush1.msra.mxu0 %v48
  %78 = vmatprep.subr.mxu0 0.0
  %79 = vmatpush1.msra.mxu0 %v49
  %80 = vmatprep.subr.mxu0 0.0
  %81 = vmatpush1.msra.mxu0 %v50
  %82 = vmatprep.subr.mxu0 0.0
  %83 = vmatpush1.msra.mxu0 %v51
  %84 = vmatprep.subr.mxu0 0.0
  %85 = vmatpush1.msra.mxu0 0.0
  %86 = vmatprep.subr.mxu0 0.0
  %87 = vmatpush1.msra.mxu0 0.0
  %88 = vmatprep.subr.mxu0 0.0
  %89 = vmatpush1.msra.mxu0 0.0
  %90 = vmatprep.subr.mxu0 0.0
  %91 = vmatpush1.msra.mxu0 0.0
  %92 = vmatprep.subr.mxu0 0.0
  %93 = vmatpush1.msra.mxu0 0.0
  %94 = vmatprep.subr.mxu0 0.0
  %95 = vmatpush1.msra.mxu0 0.0
  %96 = vmatprep.subr.mxu0 0.0
  %97 = vmatpush1.msra.mxu0 0.0
  %98 = vmatprep.subr.mxu0 0.0
  %99 = vmatpush1.msra.mxu0 0.0
  %100 = vmatprep.subr.mxu0 0.0
  %101 = vmatpush1.msra.mxu0 0.0
  %102 = vmatprep.subr.mxu0 0.0
  %103 = vmatpush1.msra.mxu0 0.0
  %104 = vmatprep.subr.mxu0 0.0
  %105 = vmatpush1.msra.mxu0 0.0
  %106 = vmatprep.subr.mxu0 0.0
  %107 = vmatpush1.msra.mxu0 0.0
  %108 = vmatprep.subr.mxu0 0.0
  %109 = vmatpush1.msra.mxu0 0.0
  %110 = vmatprep.subr.mxu0 0.0
  %111 = vmatpush1.msra.mxu0 0.0
  %112 = vmatprep.subr.mxu0 0.0
  %113 = vmatpush1.msra.mxu0 0.0
  %114 = vmatprep.subr.mxu0 0.0
  %115 = vmatpush1.msra.mxu0 0.0
  %116 = vmatprep.mubr.f32.mxu0 0.0
  %117 = vmatmul.mubr.f32.gmra.mrb[0].mxu0 %v32
  %v118 = vpop.f32.mrb[0].mxu0
  %v119 = vadd.f32 0.0, %v118
  %v120 = vpop.f32.mrb[0].mxu0
  %121 = vmatprep.mubr.f32.mxu0 0.0
  %122 = vmatmul.mubr.f32.gmra.mrb[0].mxu0 %v33
  %v123 = vpop.f32.mrb[0].mxu0
  %v124 = vadd.f32 0.0, %v123
  %v125 = vpop.f32.mrb[0].mxu0
  %126 = vmatprep.mubr.f32.mxu0 0.0
  %127 = vmatmul.mubr.f32.gmra.mrb[0].mxu0 %v34
  %v128 = vpop.f32.mrb[0].mxu0
  %v129 = vadd.f32 0.0, %v128
  %v130 = vpop.f32.mrb[0].mxu0
  %131 = vmatprep.mubr.f32.mxu0 0.0
  %132 = vmatmul.mubr.f32.gmra.mrb[0].mxu0 %v35
  %v133 = vpop.f32.mrb[0].mxu0
  %v134 = vadd.f32 0.0, %v133
  %v135 = vpop.f32.mrb[0].mxu0
  %136 = vdwg.mxu0
  %v137 = vsub.f32 %v32, %v119
  %v138 = vsub.f32 %v33, %v124
  %v139 = vsub.f32 %v34, %v129
  %v140 = vsub.f32 %v35, %v134
  %v141 = vmul.f32 %v137, %v137
  %v142 = vmul.f32 %v138, %v138
  %v143 = vmul.f32 %v139, %v139
  %v144 = vmul.f32 %v140, %v140
  %145 = vmatprep.subr.mxu0 0.0
  %146 = vmatpush1.msra.mxu0 %v36
  %147 = vmatprep.subr.mxu0 0.0
  %148 = vmatpush1.msra.mxu0 %v37
  %149 = vmatprep.subr.mxu0 0.0
  %150 = vmatpush1.msra.mxu0 %v38
  %151 = vmatprep.subr.mxu0 0.0
  %152 = vmatpush1.msra.mxu0 %v39
  %153 = vmatprep.subr.mxu0 0.0
  %154 = vmatpush1.msra.mxu0 %v40
  %155 = vmatprep.subr.mxu0 0.0
  %156 = vmatpush1.msra.mxu0 %v41
  %157 = vmatprep.subr.mxu0 0.0
  %158 = vmatpush1.msra.mxu0 %v42
  %159 = vmatprep.subr.mxu0 0.0
  %160 = vmatpush1.msra.mxu0 %v43
  %161 = vmatprep.subr.mxu0 0.0
  %162 = vmatpush1.msra.mxu0 %v44
  %163 = vmatprep.subr.mxu0 0.0
  %164 = vmatpush1.msra.mxu0 %v45
  %165 = vmatprep.subr.mxu0 0.0
  %166 = vmatpush1.msra.mxu0 %v46
  %167 = vmatprep.subr.mxu0 0.0
  %168 = vmatpush1.msra.mxu0 %v47
  %169 = vmatprep.subr.mxu0 0.0
  %170 = vmatpush1.msra.mxu0 %v48
  %171 = vmatprep.subr.mxu0 0.0
  %172 = vmatpush1.msra.mxu0 %v49
  %173 = vmatprep.subr.mxu0 0.0
  %174 = vmatpush1.msra.mxu0 %v50
  %175 = vmatprep.subr.mxu0 0.0
  %176 = vmatpush1.msra.mxu0 %v51
  %177 = vmatprep.subr.mxu0 0.0
  %178 = vmatpush1.msra.mxu0 0.0
  %179 = vmatprep.subr.mxu0 0.0
  %180 = vmatpush1.msra.mxu0 0.0
  %181 = vmatprep.subr.mxu0 0.0
  %182 = vmatpush1.msra.mxu0 0.0
  %183 = vmatprep.subr.mxu0 0.0
  %184 = vmatpush1.msra.mxu0 0.0
  %185 = vmatprep.subr.mxu0 0.0
  %186 = vmatpush1.msra.mxu0 0.0
  %187 = vmatprep.subr.mxu0 0.0
  %188 = vmatpush1.msra.mxu0 0.0
  %189 = vmatprep.subr.mxu0 0.0
  %190 = vmatpush1.msra.mxu0 0.0
  %191 = vmatprep.subr.mxu0 0.0
  %192 = vmatpush1.msra.mxu0 0.0
  %193 = vmatprep.subr.mxu0 0.0
  %194 = vmatpush1.msra.mxu0 0.0
  %195 = vmatprep.subr.mxu0 0.0
  %196 = vmatpush1.msra.mxu0 0.0
  %197 = vmatprep.subr.mxu0 0.0
  %198 = vmatpush1.msra.mxu0 0.0
  %199 = vmatprep.subr.mxu0 0.0
  %200 = vmatpush1.msra.mxu0 0.0
  %201 = vmatprep.subr.mxu0 0.0
  %202 = vmatpush1.msra.mxu0 0.0
  %203 = vmatprep.subr.mxu0 0.0
  %204 = vmatpush1.msra.mxu0 0.0
  %205 = vmatprep.subr.mxu0 0.0
  %206 = vmatpush1.msra.mxu0 0.0
  %207 = vmatprep.subr.mxu0 0.0
  %208 = vmatpush1.msra.mxu0 0.0
  %209 = vmatprep.mubr.f32.mxu0 0.0
  %210 = vmatmul.mubr.f32.gmra.mrb[0].mxu0 %v141
  %v211 = vpop.f32.mrb[0].mxu0
  %v212 = vadd.f32 1e-06, %v211
  %v213 = vpop.f32.mrb[0].mxu0
  %214 = vmatprep.mubr.f32.mxu0 0.0
  %215 = vmatmul.mubr.f32.gmra.mrb[0].mxu0 %v142
  %v216 = vpop.f32.mrb[0].mxu0
  %v217 = vadd.f32 1e-06, %v216
  %v218 = vpop.f32.mrb[0].mxu0
  %219 = vmatprep.mubr.f32.mxu0 0.0
  %220 = vmatmul.mubr.f32.gmra.mrb[0].mxu0 %v143
  %v221 = vpop.f32.mrb[0].mxu0
  %v222 = vadd.f32 1e-06, %v221
  %v223 = vpop.f32.mrb[0].mxu0
  %224 = vmatprep.mubr.f32.mxu0 0.0
  %225 = vmatmul.mubr.f32.gmra.mrb[0].mxu0 %v144
  %v226 = vpop.f32.mrb[0].mxu0
  %v227 = vadd.f32 1e-06, %v226
  %v228 = vpop.f32.mrb[0].mxu0
  %229 = vdwg.mxu0
  %v230 = vrsqrt.pop %v212
  %v231 = vrsqrt.pop %v217
  %v232 = vrsqrt.pop %v222
  %v233 = vrsqrt.pop %v227
  %v234 = vmul.f32 %v137, %v230
  %v235 = vmul.f32 %v138, %v231
  %v236 = vmul.f32 %v139, %v232
  %v237 = vmul.f32 %v140, %v233
  %v238 = vld [vmem:[%s2] sm:$0xff]
  %v239 = vld [vmem:[%s2 + $0x8] sm:$0xff]
  %v240 = vld [vmem:[%s2 + $0x10] sm:$0xff]
  %v241 = vld [vmem:[%s2 + $0x18] sm:$0xff]
  %v242 = vld [vmem:[%s2 + $0x20] sm:$0xff]
  %v243 = vld [vmem:[%s2 + $0x28] sm:$0xff]
  %v244 = vld [vmem:[%s2 + $0x30] sm:$0xff]
  %v245 = vld [vmem:[%s2 + $0x38] sm:$0xff]
  %v246 = vld [vmem:[%s2 + $0x40] sm:$0xff]
  %v247 = vld [vmem:[%s2 + $0x48] sm:$0xff]
  %v248 = vld [vmem:[%s2 + $0x50] sm:$0xff]
  %v249 = vld [vmem:[%s2 + $0x58] sm:$0xff]
  %v250 = vld [vmem:[%s2 + $0x60] sm:$0xff]
  %v251 = vld [vmem:[%s2 + $0x68] sm:$0xff]
  %v252 = vld [vmem:[%s2 + $0x70] sm:$0xff]
  %v253 = vld [vmem:[%s2 + $0x78] sm:$0xff]
  %v254 = vld [vmem:[%s2 + $0x80] sm:$0xff]
  %v255 = vld [vmem:[%s2 + $0x88] sm:$0xff]
  %v256 = vld [vmem:[%s2 + $0x90] sm:$0xff]
  %v257 = vld [vmem:[%s2 + $0x98] sm:$0xff]
  %v258 = vld [vmem:[%s2 + $0xa0] sm:$0xff]
  %v259 = vld [vmem:[%s2 + $0xa8] sm:$0xff]
  %v260 = vld [vmem:[%s2 + $0xb0] sm:$0xff]
  %v261 = vld [vmem:[%s2 + $0xb8] sm:$0xff]
  %v262 = vld [vmem:[%s2 + $0xc0] sm:$0xff]
  %v263 = vld [vmem:[%s2 + $0xc8] sm:$0xff]
  %v264 = vld [vmem:[%s2 + $0xd0] sm:$0xff]
  %v265 = vld [vmem:[%s2 + $0xd8] sm:$0xff]
  %v266 = vld [vmem:[%s2 + $0xe0] sm:$0xff]
  %v267 = vld [vmem:[%s2 + $0xe8] sm:$0xff]
  %v268 = vld [vmem:[%s2 + $0xf0] sm:$0xff]
  %v269 = vld [vmem:[%s2 + $0xf8] sm:$0xff]
  %v270 = vld [vmem:[%s3] sm:$0x3]
  %v272 = vlaneseq
  %v273 = vshrl.u32 %v272, 7
  %v274 = vsub.s32 0, %v273
  %v275 = vrot.slane %v270, %v274
  %v276 = vlaneseq
  %v277 = vshrl.u32 %v276, 7
  %v278 = vsub.s32 1, %v277
  %v279 = vrot.slane %v270, %v278
  %282 = vmatprep.subr.mxu0 %v239
  %283 = vmatpush1.msra.mxu0 %v238
  %284 = vmatprep.subr.mxu0 %v241
  %285 = vmatpush1.msra.mxu0 %v240
  %286 = vmatprep.subr.mxu0 %v243
  %287 = vmatpush1.msra.mxu0 %v242
  %288 = vmatprep.subr.mxu0 %v245
  %289 = vmatpush1.msra.mxu0 %v244
  %290 = vmatprep.subr.mxu0 %v247
  %291 = vmatpush1.msra.mxu0 %v246
  %292 = vmatprep.subr.mxu0 %v249
  %293 = vmatpush1.msra.mxu0 %v248
  %294 = vmatprep.subr.mxu0 %v251
  %295 = vmatpush1.msra.mxu0 %v250
  %296 = vmatprep.subr.mxu0 %v253
  %297 = vmatpush1.msra.mxu0 %v252
  %298 = vmatprep.subr.mxu0 %v255
  %299 = vmatpush1.msra.mxu0 %v254
  %300 = vmatprep.subr.mxu0 %v257
  %301 = vmatpush1.msra.mxu0 %v256
  %302 = vmatprep.subr.mxu0 %v259
  %303 = vmatpush1.msra.mxu0 %v258
  %304 = vmatprep.subr.mxu0 %v261
  %305 = vmatpush1.msra.mxu0 %v260
  %306 = vmatprep.subr.mxu0 %v263
  %307 = vmatpush1.msra.mxu0 %v262
  %308 = vmatprep.subr.mxu0 %v265
  %309 = vmatpush1.msra.mxu0 %v264
  %310 = vmatprep.subr.mxu0 %v267
  %311 = vmatpush1.msra.mxu0 %v266
  %312 = vmatprep.subr.mxu0 %v269
  %313 = vmatpush1.msra.mxu0 %v268
  %314 = vmatprep.subr.mxu0 0.0
  %315 = vmatpush1.msra.mxu0 0.0
  %316 = vmatprep.subr.mxu0 0.0
  %317 = vmatpush1.msra.mxu0 0.0
  %318 = vmatprep.subr.mxu0 0.0
  %319 = vmatpush1.msra.mxu0 0.0
  %320 = vmatprep.subr.mxu0 0.0
  %321 = vmatpush1.msra.mxu0 0.0
  %322 = vmatprep.subr.mxu0 0.0
  %323 = vmatpush1.msra.mxu0 0.0
  %324 = vmatprep.subr.mxu0 0.0
  %325 = vmatpush1.msra.mxu0 0.0
  %326 = vmatprep.subr.mxu0 0.0
  %327 = vmatpush1.msra.mxu0 0.0
  %328 = vmatprep.subr.mxu0 0.0
  %329 = vmatpush1.msra.mxu0 0.0
  %330 = vmatprep.subr.mxu0 0.0
  %331 = vmatpush1.msra.mxu0 0.0
  %332 = vmatprep.subr.mxu0 0.0
  %333 = vmatpush1.msra.mxu0 0.0
  %334 = vmatprep.subr.mxu0 0.0
  %335 = vmatpush1.msra.mxu0 0.0
  %336 = vmatprep.subr.mxu0 0.0
  %337 = vmatpush1.msra.mxu0 0.0
  %338 = vmatprep.subr.mxu0 0.0
  %339 = vmatpush1.msra.mxu0 0.0
  %340 = vmatprep.subr.mxu0 0.0
  %341 = vmatpush1.msra.mxu0 0.0
  %342 = vmatprep.subr.mxu0 0.0
  %343 = vmatpush1.msra.mxu0 0.0
  %344 = vmatprep.subr.mxu0 0.0
  %345 = vmatpush1.msra.mxu0 0.0
  %346 = vmatprep.mubr.f32.mxu0 0.0
  %347 = vmatmul.mubr.f32.gmra.mrb[0].mxu0 %v234
  %v348 = vpop.f32.mrb[0].mxu0
  %v349 = vadd.f32 %v275, %v348
  %v350 = vpop.f32.mrb[0].mxu0
  %v351 = vadd.f32 %v279, %v350
  %352 = vmatprep.mubr.f32.mxu0 0.0
  %353 = vmatmul.mubr.f32.gmra.mrb[0].mxu0 %v235
  %v354 = vpop.f32.mrb[0].mxu0
  %v355 = vadd.f32 %v275, %v354
  %v356 = vpop.f32.mrb[0].mxu0
  %v357 = vadd.f32 %v279, %v356
  %358 = vmatprep.mubr.f32.mxu0 0.0
  %359 = vmatmul.mubr.f32.gmra.mrb[0].mxu0 %v236
  %v360 = vpop.f32.mrb[0].mxu0
  %v361 = vadd.f32 %v275, %v360
  %v362 = vpop.f32.mrb[0].mxu0
  %v363 = vadd.f32 %v279, %v362
  %364 = vmatprep.mubr.f32.mxu0 0.0
  %365 = vmatmul.mubr.f32.gmra.mrb[0].mxu0 %v237
  %v366 = vpop.f32.mrb[0].mxu0
  %v367 = vadd.f32 %v275, %v366
  %v368 = vpop.f32.mrb[0].mxu0
  %v369 = vadd.f32 %v279, %v368
  %370 = vdwg.mxu0
  %371 = vrot.lane.b32.xlu0 %v349, 24
  %v372 = vpop.permute.xlu0 %371
  %373 = vrot.lane.b32.xlu0 %v355, 24
  %v374 = vpop.permute.xlu0 %373
  %375 = vrot.lane.b32.xlu0 %v361, 24
  %v376 = vpop.permute.xlu0 %375
  %377 = vrot.lane.b32.xlu0 %v367, 24
  %v378 = vpop.permute.xlu0 %377
  %379 = vrot.lane.b32.xlu0 %v349, 16
  %v380 = vpop.permute.xlu0 %379
  %381 = vrot.lane.b32.xlu0 %v355, 16
  %v382 = vpop.permute.xlu0 %381
  %383 = vrot.lane.b32.xlu0 %v361, 16
  %v384 = vpop.permute.xlu0 %383
  %385 = vrot.lane.b32.xlu0 %v367, 16
  %v386 = vpop.permute.xlu0 %385
  %387 = vrot.lane.b32.xlu0 %v349, 8
  %v388 = vpop.permute.xlu0 %387
  %389 = vrot.lane.b32.xlu0 %v355, 8
  %v390 = vpop.permute.xlu0 %389
  %391 = vrot.lane.b32.xlu0 %v361, 8
  %v392 = vpop.permute.xlu0 %391
  %393 = vrot.lane.b32.xlu0 %v367, 8
  %v394 = vpop.permute.xlu0 %393
  %395 = vrot.lane.b32.xlu0 %v349, 120
  %v396 = vpop.permute.xlu0 %395
  %397 = vrot.lane.b32.xlu0 %v355, 120
  %v398 = vpop.permute.xlu0 %397
  %399 = vrot.lane.b32.xlu0 %v361, 120
  %v400 = vpop.permute.xlu0 %399
  %401 = vrot.lane.b32.xlu0 %v367, 120
  %v402 = vpop.permute.xlu0 %401
  %403 = vrot.lane.b32.xlu0 %v349, 112
  %v404 = vpop.permute.xlu0 %403
  %405 = vrot.lane.b32.xlu0 %v355, 112
  %v406 = vpop.permute.xlu0 %405
  %407 = vrot.lane.b32.xlu0 %v361, 112
  %v408 = vpop.permute.xlu0 %407
  %409 = vrot.lane.b32.xlu0 %v367, 112
  %v410 = vpop.permute.xlu0 %409
  %411 = vrot.lane.b32.xlu0 %v349, 104
  %v412 = vpop.permute.xlu0 %411
  %413 = vrot.lane.b32.xlu0 %v355, 104
  %v414 = vpop.permute.xlu0 %413
  %415 = vrot.lane.b32.xlu0 %v361, 104
  %v416 = vpop.permute.xlu0 %415
  %417 = vrot.lane.b32.xlu0 %v367, 104
  %v418 = vpop.permute.xlu0 %417
  %v419 = vld [vmem:[%s4] sm:$0xff]
  %v420 = vld [vmem:[%s4 + $0x8] sm:$0xff]
  %v421 = vld [vmem:[%s4 + $0x10] sm:$0xff]
  %v422 = vld [vmem:[%s4 + $0x18] sm:$0xff]
  %v423 = vld [vmem:[%s4 + $0x20] sm:$0xff]
  %v424 = vld [vmem:[%s4 + $0x28] sm:$0xff]
  %v425 = vld [vmem:[%s4 + $0x30] sm:$0x1]
  %v426 = vlaneseq
  %v427 = vshrl.u32 %v426, 7
  %v428 = vsub.s32 0, %v427
  %v429 = vrot.slane %v419, %v428
  %v430 = vmul.f32 %v372, %v429
  %v431 = vmul.f32 %v374, %v429
  %v432 = vmul.f32 %v376, %v429
  %v433 = vmul.f32 %v378, %v429
  %v434 = vlaneseq
  %v435 = vshrl.u32 %v434, 7
  %v436 = vsub.s32 1, %v435
  %v437 = vrot.slane %v419, %v436
  %v438 = vmul.f32 %v380, %v437
  %v439 = vmul.f32 %v382, %v437
  %v440 = vmul.f32 %v384, %v437
  %v441 = vmul.f32 %v386, %v437
  %v442 = vadd.f32 %v430, %v438
  %v443 = vadd.f32 %v431, %v439
  %v444 = vadd.f32 %v432, %v440
  %v445 = vadd.f32 %v433, %v441
  %v446 = vlaneseq
  %v447 = vshrl.u32 %v446, 7
  %v448 = vsub.s32 2, %v447
  %v449 = vrot.slane %v419, %v448
  %v450 = vmul.f32 %v388, %v449
  %v451 = vmul.f32 %v390, %v449
  %v452 = vmul.f32 %v392, %v449
  %v453 = vmul.f32 %v394, %v449
  %v454 = vadd.f32 %v442, %v450
  %v455 = vadd.f32 %v443, %v451
  %v456 = vadd.f32 %v444, %v452
  %v457 = vadd.f32 %v445, %v453
  %v458 = vlaneseq
  %v459 = vshrl.u32 %v458, 7
  %v460 = vsub.s32 3, %v459
  %v461 = vrot.slane %v419, %v460
  %v462 = vmul.f32 %v349, %v461
  %v463 = vmul.f32 %v355, %v461
  %v464 = vmul.f32 %v361, %v461
  %v465 = vmul.f32 %v367, %v461
  %v466 = vadd.f32 %v454, %v462
  %v467 = vadd.f32 %v455, %v463
  %v468 = vadd.f32 %v456, %v464
  %v469 = vadd.f32 %v457, %v465
  %v470 = vlaneseq
  %v471 = vshrl.u32 %v470, 7
  %v472 = vsub.s32 4, %v471
  %v473 = vrot.slane %v419, %v472
  %v474 = vmul.f32 %v396, %v473
  %v475 = vmul.f32 %v398, %v473
  %v476 = vmul.f32 %v400, %v473
  %v477 = vmul.f32 %v402, %v473
  %v478 = vadd.f32 %v466, %v474
  %v479 = vadd.f32 %v467, %v475
  %v480 = vadd.f32 %v468, %v476
  %v481 = vadd.f32 %v469, %v477
  %v482 = vlaneseq
  %v483 = vshrl.u32 %v482, 7
  %v484 = vsub.s32 5, %v483
  %v485 = vrot.slane %v419, %v484
  %v486 = vmul.f32 %v404, %v485
  %v487 = vmul.f32 %v406, %v485
  %v488 = vmul.f32 %v408, %v485
  %v489 = vmul.f32 %v410, %v485
  %v490 = vadd.f32 %v478, %v486
  %v491 = vadd.f32 %v479, %v487
  %v492 = vadd.f32 %v480, %v488
  %v493 = vadd.f32 %v481, %v489
  %v494 = vlaneseq
  %v495 = vshrl.u32 %v494, 7
  %v496 = vsub.s32 6, %v495
  %v497 = vrot.slane %v419, %v496
  %v498 = vmul.f32 %v412, %v497
  %v499 = vmul.f32 %v414, %v497
  %v500 = vmul.f32 %v416, %v497
  %v501 = vmul.f32 %v418, %v497
  %v502 = vadd.f32 %v490, %v498
  %v503 = vadd.f32 %v491, %v499
  %v504 = vadd.f32 %v492, %v500
  %v505 = vadd.f32 %v493, %v501
  %506 = vst [vmem:[#allocation2] sm:$0xff] %v502
  %507 = vst [vmem:[#allocation2 + $0x8] sm:$0xff] %v503
  %508 = vst [vmem:[#allocation2 + $0x10] sm:$0xff] %v504
  %509 = vst [vmem:[#allocation2 + $0x18] sm:$0xff] %v505
  %v510 = vlaneseq
  %v511 = vshrl.u32 %v510, 7
  %v512 = vsub.s32 7, %v511
  %v513 = vrot.slane %v419, %v512
  %v514 = vmul.f32 %v372, %v513
  %v515 = vmul.f32 %v374, %v513
  %v516 = vmul.f32 %v376, %v513
  %v517 = vmul.f32 %v378, %v513
  %v518 = vlaneseq
  %v519 = vshrl.u32 %v518, 7
  %v520 = vsub.s32 0, %v519
  %v521 = vrot.slane %v420, %v520
  %v522 = vmul.f32 %v380, %v521
  %v523 = vmul.f32 %v382, %v521
  %v524 = vmul.f32 %v384, %v521
  %v525 = vmul.f32 %v386, %v521
  %v526 = vadd.f32 %v514, %v522
  %v527 = vadd.f32 %v515, %v523
  %v528 = vadd.f32 %v516, %v524
  %v529 = vadd.f32 %v517, %v525
  %v530 = vlaneseq
  %v531 = vshrl.u32 %v530, 7
  %v532 = vsub.s32 1, %v531
  %v533 = vrot.slane %v420, %v532
  %v534 = vmul.f32 %v388, %v533
  %v535 = vmul.f32 %v390, %v533
  %v536 = vmul.f32 %v392, %v533
  %v537 = vmul.f32 %v394, %v533
  %v538 = vadd.f32 %v526, %v534
  %v539 = vadd.f32 %v527, %v535
  %v540 = vadd.f32 %v528, %v536
  %v541 = vadd.f32 %v529, %v537
  %v542 = vlaneseq
  %v543 = vshrl.u32 %v542, 7
  %v544 = vsub.s32 2, %v543
  %v545 = vrot.slane %v420, %v544
  %v546 = vmul.f32 %v349, %v545
  %v547 = vmul.f32 %v355, %v545
  %v548 = vmul.f32 %v361, %v545
  %v549 = vmul.f32 %v367, %v545
  %v550 = vadd.f32 %v538, %v546
  %v551 = vadd.f32 %v539, %v547
  %v552 = vadd.f32 %v540, %v548
  %v553 = vadd.f32 %v541, %v549
  %v554 = vlaneseq
  %v555 = vshrl.u32 %v554, 7
  %v556 = vsub.s32 3, %v555
  %v557 = vrot.slane %v420, %v556
  %v558 = vmul.f32 %v396, %v557
  %v559 = vmul.f32 %v398, %v557
  %v560 = vmul.f32 %v400, %v557
  %v561 = vmul.f32 %v402, %v557
  %v562 = vadd.f32 %v550, %v558
  %v563 = vadd.f32 %v551, %v559
  %v564 = vadd.f32 %v552, %v560
  %v565 = vadd.f32 %v553, %v561
  %v566 = vlaneseq
  %v567 = vshrl.u32 %v566, 7
  %v568 = vsub.s32 4, %v567
  %v569 = vrot.slane %v420, %v568
  %v570 = vmul.f32 %v404, %v569
  %v571 = vmul.f32 %v406, %v569
  %v572 = vmul.f32 %v408, %v569
  %v573 = vmul.f32 %v410, %v569
  %v574 = vadd.f32 %v562, %v570
  %v575 = vadd.f32 %v563, %v571
  %v576 = vadd.f32 %v564, %v572
  %v577 = vadd.f32 %v565, %v573
  %v578 = vlaneseq
  %v579 = vshrl.u32 %v578, 7
  %v580 = vsub.s32 5, %v579
  %v581 = vrot.slane %v420, %v580
  %v582 = vmul.f32 %v412, %v581
  %v583 = vmul.f32 %v414, %v581
  %v584 = vmul.f32 %v416, %v581
  %v585 = vmul.f32 %v418, %v581
  %v586 = vadd.f32 %v574, %v582
  %v587 = vadd.f32 %v575, %v583
  %v588 = vadd.f32 %v576, %v584
  %v589 = vadd.f32 %v577, %v585
  %590 = vst [vmem:[#allocation2 + $0x20] sm:$0xff] %v586
  %591 = vst [vmem:[#allocation2 + $0x28] sm:$0xff] %v587
  %592 = vst [vmem:[#allocation2 + $0x30] sm:$0xff] %v588
  %593 = vst [vmem:[#allocation2 + $0x38] sm:$0xff] %v589
  %v594 = vlaneseq
  %v595 = vshrl.u32 %v594, 7
  %v596 = vsub.s32 6, %v595
  %v597 = vrot.slane %v420, %v596
  %v598 = vmul.f32 %v372, %v597
  %v599 = vmul.f32 %v374, %v597
  %v600 = vmul.f32 %v376, %v597
  %v601 = vmul.f32 %v378, %v597
  %v602 = vlaneseq
  %v603 = vshrl.u32 %v602, 7
  %v604 = vsub.s32 7, %v603
  %v605 = vrot.slane %v420, %v604
  %v606 = vmul.f32 %v380, %v605
  %v607 = vmul.f32 %v382, %v605
  %v608 = vmul.f32 %v384, %v605
  %v609 = vmul.f32 %v386, %v605
  %v610 = vadd.f32 %v598, %v606
  %v611 = vadd.f32 %v599, %v607
  %v612 = vadd.f32 %v600, %v608
  %v613 = vadd.f32 %v601, %v609
  %v614 = vlaneseq
  %v615 = vshrl.u32 %v614, 7
  %v616 = vsub.s32 0, %v615
  %v617 = vrot.slane %v421, %v616
  %v618 = vmul.f32 %v388, %v617
  %v619 = vmul.f32 %v390, %v617
  %v620 = vmul.f32 %v392, %v617
  %v621 = vmul.f32 %v394, %v617
  %v622 = vadd.f32 %v610, %v618
  %v623 = vadd.f32 %v611, %v619
  %v624 = vadd.f32 %v612, %v620
  %v625 = vadd.f32 %v613, %v621
  %v626 = vlaneseq
  %v627 = vshrl.u32 %v626, 7
  %v628 = vsub.s32 1, %v627
  %v629 = vrot.slane %v421, %v628
  %v630 = vmul.f32 %v349, %v629
  %v631 = vmul.f32 %v355, %v629
  %v632 = vmul.f32 %v361, %v629
  %v633 = vmul.f32 %v367, %v629
  %v634 = vadd.f32 %v622, %v630
  %v635 = vadd.f32 %v623, %v631
  %v636 = vadd.f32 %v624, %v632
  %v637 = vadd.f32 %v625, %v633
  %v638 = vlaneseq
  %v639 = vshrl.u32 %v638, 7
  %v640 = vsub.s32 2, %v639
  %v641 = vrot.slane %v421, %v640
  %v642 = vmul.f32 %v396, %v641
  %v643 = vmul.f32 %v398, %v641
  %v644 = vmul.f32 %v400, %v641
  %v645 = vmul.f32 %v402, %v641
  %v646 = vadd.f32 %v634, %v642
  %v647 = vadd.f32 %v635, %v643
  %v648 = vadd.f32 %v636, %v644
  %v649 = vadd.f32 %v637, %v645
  %v650 = vlaneseq
  %v651 = vshrl.u32 %v650, 7
  %v652 = vsub.s32 3, %v651
  %v653 = vrot.slane %v421, %v652
  %v654 = vmul.f32 %v404, %v653
  %v655 = vmul.f32 %v406, %v653
  %v656 = vmul.f32 %v408, %v653
  %v657 = vmul.f32 %v410, %v653
  %v658 = vadd.f32 %v646, %v654
  %v659 = vadd.f32 %v647, %v655
  %v660 = vadd.f32 %v648, %v656
  %v661 = vadd.f32 %v649, %v657
  %v662 = vlaneseq
  %v663 = vshrl.u32 %v662, 7
  %v664 = vsub.s32 4, %v663
  %v665 = vrot.slane %v421, %v664
  %v666 = vmul.f32 %v412, %v665
  %v667 = vmul.f32 %v414, %v665
  %v668 = vmul.f32 %v416, %v665
  %v669 = vmul.f32 %v418, %v665
  %v670 = vadd.f32 %v658, %v666
  %v671 = vadd.f32 %v659, %v667
  %v672 = vadd.f32 %v660, %v668
  %v673 = vadd.f32 %v661, %v669
  %674 = vst [vmem:[#allocation2 + $0x40] sm:$0xff] %v670
  %675 = vst [vmem:[#allocation2 + $0x48] sm:$0xff] %v671
  %676 = vst [vmem:[#allocation2 + $0x50] sm:$0xff] %v672
  %677 = vst [vmem:[#allocation2 + $0x58] sm:$0xff] %v673
  %v678 = vlaneseq
  %v679 = vshrl.u32 %v678, 7
  %v680 = vsub.s32 5, %v679
  %v681 = vrot.slane %v421, %v680
  %v682 = vmul.f32 %v372, %v681
  %v683 = vmul.f32 %v374, %v681
  %v684 = vmul.f32 %v376, %v681
  %v685 = vmul.f32 %v378, %v681
  %v686 = vlaneseq
  %v687 = vshrl.u32 %v686, 7
  %v688 = vsub.s32 6, %v687
  %v689 = vrot.slane %v421, %v688
  %v690 = vmul.f32 %v380, %v689
  %v691 = vmul.f32 %v382, %v689
  %v692 = vmul.f32 %v384, %v689
  %v693 = vmul.f32 %v386, %v689
  %v694 = vadd.f32 %v682, %v690
  %v695 = vadd.f32 %v683, %v691
  %v696 = vadd.f32 %v684, %v692
  %v697 = vadd.f32 %v685, %v693
  %v698 = vlaneseq
  %v699 = vshrl.u32 %v698, 7
  %v700 = vsub.s32 7, %v699
  %v701 = vrot.slane %v421, %v700
  %v702 = vmul.f32 %v388, %v701
  %v703 = vmul.f32 %v390, %v701
  %v704 = vmul.f32 %v392, %v701
  %v705 = vmul.f32 %v394, %v701
  %v706 = vadd.f32 %v694, %v702
  %v707 = vadd.f32 %v695, %v703
  %v708 = vadd.f32 %v696, %v704
  %v709 = vadd.f32 %v697, %v705
  %v710 = vlaneseq
  %v711 = vshrl.u32 %v710, 7
  %v712 = vsub.s32 0, %v711
  %v713 = vrot.slane %v422, %v712
  %v714 = vmul.f32 %v349, %v713
  %v715 = vmul.f32 %v355, %v713
  %v716 = vmul.f32 %v361, %v713
  %v717 = vmul.f32 %v367, %v713
  %v718 = vadd.f32 %v706, %v714
  %v719 = vadd.f32 %v707, %v715
  %v720 = vadd.f32 %v708, %v716
  %v721 = vadd.f32 %v709, %v717
  %v722 = vlaneseq
  %v723 = vshrl.u32 %v722, 7
  %v724 = vsub.s32 1, %v723
  %v725 = vrot.slane %v422, %v724
  %v726 = vmul.f32 %v396, %v725
  %v727 = vmul.f32 %v398, %v725
  %v728 = vmul.f32 %v400, %v725
  %v729 = vmul.f32 %v402, %v725
  %v730 = vadd.f32 %v718, %v726
  %v731 = vadd.f32 %v719, %v727
  %v732 = vadd.f32 %v720, %v728
  %v733 = vadd.f32 %v721, %v729
  %v734 = vlaneseq
  %v735 = vshrl.u32 %v734, 7
  %v736 = vsub.s32 2, %v735
  %v737 = vrot.slane %v422, %v736
  %v738 = vmul.f32 %v404, %v737
  %v739 = vmul.f32 %v406, %v737
  %v740 = vmul.f32 %v408, %v737
  %v741 = vmul.f32 %v410, %v737
  %v742 = vadd.f32 %v730, %v738
  %v743 = vadd.f32 %v731, %v739
  %v744 = vadd.f32 %v732, %v740
  %v745 = vadd.f32 %v733, %v741
  %v746 = vlaneseq
  %v747 = vshrl.u32 %v746, 7
  %v748 = vsub.s32 3, %v747
  %v749 = vrot.slane %v422, %v748
  %v750 = vmul.f32 %v412, %v749
  %v751 = vmul.f32 %v414, %v749
  %v752 = vmul.f32 %v416, %v749
  %v753 = vmul.f32 %v418, %v749
  %v754 = vadd.f32 %v742, %v750
  %v755 = vadd.f32 %v743, %v751
  %v756 = vadd.f32 %v744, %v752
  %v757 = vadd.f32 %v745, %v753
  %758 = vst [vmem:[#allocation2 + $0x60] sm:$0xff] %v754
  %759 = vst [vmem:[#allocation2 + $0x68] sm:$0xff] %v755
  %760 = vst [vmem:[#allocation2 + $0x70] sm:$0xff] %v756
  %761 = vst [vmem:[#allocation2 + $0x78] sm:$0xff] %v757
  %v762 = vlaneseq
  %v763 = vshrl.u32 %v762, 7
  %v764 = vsub.s32 4, %v763
  %v765 = vrot.slane %v422, %v764
  %v766 = vmul.f32 %v372, %v765
  %v767 = vmul.f32 %v374, %v765
  %v768 = vmul.f32 %v376, %v765
  %v769 = vmul.f32 %v378, %v765
  %v770 = vlaneseq
  %v771 = vshrl.u32 %v770, 7
  %v772 = vsub.s32 5, %v771
  %v773 = vrot.slane %v422, %v772
  %v774 = vmul.f32 %v380, %v773
  %v775 = vmul.f32 %v382, %v773
  %v776 = vmul.f32 %v384, %v773
  %v777 = vmul.f32 %v386, %v773
  %v778 = vadd.f32 %v766, %v774
  %v779 = vadd.f32 %v767, %v775
  %v780 = vadd.f32 %v768, %v776
  %v781 = vadd.f32 %v769, %v777
  %v782 = vlaneseq
  %v783 = vshrl.u32 %v782, 7
  %v784 = vsub.s32 6, %v783
  %v785 = vrot.slane %v422, %v784
  %v786 = vmul.f32 %v388, %v785
  %v787 = vmul.f32 %v390, %v785
  %v788 = vmul.f32 %v392, %v785
  %v789 = vmul.f32 %v394, %v785
  %v790 = vadd.f32 %v778, %v786
  %v791 = vadd.f32 %v779, %v787
  %v792 = vadd.f32 %v780, %v788
  %v793 = vadd.f32 %v781, %v789
  %v794 = vlaneseq
  %v795 = vshrl.u32 %v794, 7
  %v796 = vsub.s32 7, %v795
  %v797 = vrot.slane %v422, %v796
  %v798 = vmul.f32 %v349, %v797
  %v799 = vmul.f32 %v355, %v797
  %v800 = vmul.f32 %v361, %v797
  %v801 = vmul.f32 %v367, %v797
  %v802 = vadd.f32 %v790, %v798
  %v803 = vadd.f32 %v791, %v799
  %v804 = vadd.f32 %v792, %v800
  %v805 = vadd.f32 %v793, %v801
  %v806 = vlaneseq
  %v807 = vshrl.u32 %v806, 7
  %v808 = vsub.s32 0, %v807
  %v809 = vrot.slane %v423, %v808
  %v810 = vmul.f32 %v396, %v809
  %v811 = vmul.f32 %v398, %v809
  %v812 = vmul.f32 %v400, %v809
  %v813 = vmul.f32 %v402, %v809
  %v814 = vadd.f32 %v802, %v810
  %v815 = vadd.f32 %v803, %v811
  %v816 = vadd.f32 %v804, %v812
  %v817 = vadd.f32 %v805, %v813
  %v818 = vlaneseq
  %v819 = vshrl.u32 %v818, 7
  %v820 = vsub.s32 1, %v819
  %v821 = vrot.slane %v423, %v820
  %v822 = vmul.f32 %v404, %v821
  %v823 = vmul.f32 %v406, %v821
  %v824 = vmul.f32 %v408, %v821
  %v825 = vmul.f32 %v410, %v821
  %v826 = vadd.f32 %v814, %v822
  %v827 = vadd.f32 %v815, %v823
  %v828 = vadd.f32 %v816, %v824
  %v829 = vadd.f32 %v817, %v825
  %v830 = vlaneseq
  %v831 = vshrl.u32 %v830, 7
  %v832 = vsub.s32 2, %v831
  %v833 = vrot.slane %v423, %v832
  %v834 = vmul.f32 %v412, %v833
  %v835 = vmul.f32 %v414, %v833
  %v836 = vmul.f32 %v416, %v833
  %v837 = vmul.f32 %v418, %v833
  %v838 = vadd.f32 %v826, %v834
  %v839 = vadd.f32 %v827, %v835
  %v840 = vadd.f32 %v828, %v836
  %v841 = vadd.f32 %v829, %v837
  %842 = vst [vmem:[#allocation2 + $0x80] sm:$0xff] %v838
  %843 = vst [vmem:[#allocation2 + $0x88] sm:$0xff] %v839
  %844 = vst [vmem:[#allocation2 + $0x90] sm:$0xff] %v840
  %845 = vst [vmem:[#allocation2 + $0x98] sm:$0xff] %v841
  %v846 = vlaneseq
  %v847 = vshrl.u32 %v846, 7
  %v848 = vsub.s32 3, %v847
  %v849 = vrot.slane %v423, %v848
  %v850 = vmul.f32 %v372, %v849
  %v851 = vmul.f32 %v374, %v849
  %v852 = vmul.f32 %v376, %v849
  %v853 = vmul.f32 %v378, %v849
  %v854 = vlaneseq
  %v855 = vshrl.u32 %v854, 7
  %v856 = vsub.s32 4, %v855
  %v857 = vrot.slane %v423, %v856
  %v858 = vmul.f32 %v380, %v857
  %v859 = vmul.f32 %v382, %v857
  %v860 = vmul.f32 %v384, %v857
  %v861 = vmul.f32 %v386, %v857
  %v862 = vadd.f32 %v850, %v858
  %v863 = vadd.f32 %v851, %v859
  %v864 = vadd.f32 %v852, %v860
  %v865 = vadd.f32 %v853, %v861
  %v866 = vlaneseq
  %v867 = vshrl.u32 %v866, 7
  %v868 = vsub.s32 5, %v867
  %v869 = vrot.slane %v423, %v868
  %v870 = vmul.f32 %v388, %v869
  %v871 = vmul.f32 %v390, %v869
  %v872 = vmul.f32 %v392, %v869
  %v873 = vmul.f32 %v394, %v869
  %v874 = vadd.f32 %v862, %v870
  %v875 = vadd.f32 %v863, %v871
  %v876 = vadd.f32 %v864, %v872
  %v877 = vadd.f32 %v865, %v873
  %v878 = vlaneseq
  %v879 = vshrl.u32 %v878, 7
  %v880 = vsub.s32 6, %v879
  %v881 = vrot.slane %v423, %v880
  %v882 = vmul.f32 %v349, %v881
  %v883 = vmul.f32 %v355, %v881
  %v884 = vmul.f32 %v361, %v881
  %v885 = vmul.f32 %v367, %v881
  %v886 = vadd.f32 %v874, %v882
  %v887 = vadd.f32 %v875, %v883
  %v888 = vadd.f32 %v876, %v884
  %v889 = vadd.f32 %v877, %v885
  %v890 = vlaneseq
  %v891 = vshrl.u32 %v890, 7
  %v892 = vsub.s32 7, %v891
  %v893 = vrot.slane %v423, %v892
  %v894 = vmul.f32 %v396, %v893
  %v895 = vmul.f32 %v398, %v893
  %v896 = vmul.f32 %v400, %v893
  %v897 = vmul.f32 %v402, %v893
  %v898 = vadd.f32 %v886, %v894
  %v899 = vadd.f32 %v887, %v895
  %v900 = vadd.f32 %v888, %v896
  %v901 = vadd.f32 %v889, %v897
  %v902 = vlaneseq
  %v903 = vshrl.u32 %v902, 7
  %v904 = vsub.s32 0, %v903
  %v905 = vrot.slane %v424, %v904
  %v906 = vmul.f32 %v404, %v905
  %v907 = vmul.f32 %v406, %v905
  %v908 = vmul.f32 %v408, %v905
  %v909 = vmul.f32 %v410, %v905
  %v910 = vadd.f32 %v898, %v906
  %v911 = vadd.f32 %v899, %v907
  %v912 = vadd.f32 %v900, %v908
  %v913 = vadd.f32 %v901, %v909
  %v914 = vlaneseq
  %v915 = vshrl.u32 %v914, 7
  %v916 = vsub.s32 1, %v915
  %v917 = vrot.slane %v424, %v916
  %v918 = vmul.f32 %v412, %v917
  %v919 = vmul.f32 %v414, %v917
  %v920 = vmul.f32 %v416, %v917
  %v921 = vmul.f32 %v418, %v917
  %v922 = vadd.f32 %v910, %v918
  %v923 = vadd.f32 %v911, %v919
  %v924 = vadd.f32 %v912, %v920
  %v925 = vadd.f32 %v913, %v921
  %926 = vst [vmem:[#allocation2 + $0xa0] sm:$0xff] %v922
  %927 = vst [vmem:[#allocation2 + $0xa8] sm:$0xff] %v923
  %928 = vst [vmem:[#allocation2 + $0xb0] sm:$0xff] %v924
  %929 = vst [vmem:[#allocation2 + $0xb8] sm:$0xff] %v925
  %v930 = vlaneseq
  %v931 = vshrl.u32 %v930, 7
  %v932 = vsub.s32 2, %v931
  %v933 = vrot.slane %v424, %v932
  %v934 = vmul.f32 %v372, %v933
  %v935 = vmul.f32 %v374, %v933
  %v936 = vmul.f32 %v376, %v933
  %v937 = vmul.f32 %v378, %v933
  %v938 = vlaneseq
  %v939 = vshrl.u32 %v938, 7
  %v940 = vsub.s32 3, %v939
  %v941 = vrot.slane %v424, %v940
  %v942 = vmul.f32 %v380, %v941
  %v943 = vmul.f32 %v382, %v941
  %v944 = vmul.f32 %v384, %v941
  %v945 = vmul.f32 %v386, %v941
  %v946 = vadd.f32 %v934, %v942
  %v947 = vadd.f32 %v935, %v943
  %v948 = vadd.f32 %v936, %v944
  %v949 = vadd.f32 %v937, %v945
  %v950 = vlaneseq
  %v951 = vshrl.u32 %v950, 7
  %v952 = vsub.s32 4, %v951
  %v953 = vrot.slane %v424, %v952
  %v954 = vmul.f32 %v388, %v953
  %v955 = vmul.f32 %v390, %v953
  %v956 = vmul.f32 %v392, %v953
  %v957 = vmul.f32 %v394, %v953
  %v958 = vadd.f32 %v946, %v954
  %v959 = vadd.f32 %v947, %v955
  %v960 = vadd.f32 %v948, %v956
  %v961 = vadd.f32 %v949, %v957
  %v962 = vlaneseq
  %v963 = vshrl.u32 %v962, 7
  %v964 = vsub.s32 5, %v963
  %v965 = vrot.slane %v424, %v964
  %v966 = vmul.f32 %v349, %v965
  %v967 = vmul.f32 %v355, %v965
  %v968 = vmul.f32 %v361, %v965
  %v969 = vmul.f32 %v367, %v965
  %v970 = vadd.f32 %v958, %v966
  %v971 = vadd.f32 %v959, %v967
  %v972 = vadd.f32 %v960, %v968
  %v973 = vadd.f32 %v961, %v969
  %v974 = vlaneseq
  %v975 = vshrl.u32 %v974, 7
  %v976 = vsub.s32 6, %v975
  %v977 = vrot.slane %v424, %v976
  %v978 = vmul.f32 %v396, %v977
  %v979 = vmul.f32 %v398, %v977
  %v980 = vmul.f32 %v400, %v977
  %v981 = vmul.f32 %v402, %v977
  %v982 = vadd.f32 %v970, %v978
  %v983 = vadd.f32 %v971, %v979
  %v984 = vadd.f32 %v972, %v980
  %v985 = vadd.f32 %v973, %v981
  %v986 = vlaneseq
  %v987 = vshrl.u32 %v986, 7
  %v988 = vsub.s32 7, %v987
  %v989 = vrot.slane %v424, %v988
  %v990 = vmul.f32 %v404, %v989
  %v991 = vmul.f32 %v406, %v989
  %v992 = vmul.f32 %v408, %v989
  %v993 = vmul.f32 %v410, %v989
  %v994 = vadd.f32 %v982, %v990
  %v995 = vadd.f32 %v983, %v991
  %v996 = vadd.f32 %v984, %v992
  %v997 = vadd.f32 %v985, %v993
  %v998 = vlaneseq
  %v999 = vshrl.u32 %v998, 7
  %v1000 = vsub.s32 0, %v999
  %v1001 = vrot.slane %v425, %v1000
  %v1002 = vmul.f32 %v412, %v1001
  %v1003 = vmul.f32 %v414, %v1001
  %v1004 = vmul.f32 %v416, %v1001
  %v1005 = vmul.f32 %v418, %v1001
  %v1006 = vadd.f32 %v994, %v1002
  %v1007 = vadd.f32 %v995, %v1003
  %v1008 = vadd.f32 %v996, %v1004
  %v1009 = vadd.f32 %v997, %v1005
  %1010 = vst [vmem:[#allocation2 + $0xc0] sm:$0xff] %v1006
  %1011 = vst [vmem:[#allocation2 + $0xc8] sm:$0xff] %v1007
  %1012 = vst [vmem:[#allocation2 + $0xd0] sm:$0xff] %v1008
  %1013 = vst [vmem:[#allocation2 + $0xd8] sm:$0xff] %v1009
  %v1014 = vld [vmem:[%s6] sm:$0xff]
  %v1015 = vld [vmem:[%s6 + $0x8] sm:$0xff]
  %v1016 = vld [vmem:[%s6 + $0x10] sm:$0xff]
  %v1017 = vld [vmem:[%s6 + $0x18] sm:$0xff]
  %1018 = vst [vmem:[#allocation2 + $0xe0] sm:$0xff] %v1014
  %1019 = vst [vmem:[#allocation2 + $0xe8] sm:$0xff] %v1015
  %1020 = vst [vmem:[#allocation2 + $0xf0] sm:$0xff] %v1016
  %1021 = vst [vmem:[#allocation2 + $0xf8] sm:$0xff] %v1017
  %v1022 = vld [vmem:[%s5] sm:$0xff]
  %v1023 = vld [vmem:[%s5 + $0x8] sm:$0xff]
  %v1024 = vld [vmem:[%s5 + $0x10] sm:$0xff]
  %v1025 = vld [vmem:[%s5 + $0x18] sm:$0xff]
  %v1026 = vld [vmem:[%s5 + $0x20] sm:$0xff]
  %v1027 = vld [vmem:[%s5 + $0x28] sm:$0xff]
  %v1028 = vld [vmem:[%s5 + $0x30] sm:$0xff]
  %v1029 = vld [vmem:[%s5 + $0x38] sm:$0xff]
  %v1030 = vld [vmem:[#allocation2] sm:$0xff]
  %v1031 = vld [vmem:[#allocation2 + $0x8] sm:$0xff]
  %v1032 = vld [vmem:[#allocation2 + $0x10] sm:$0xff]
  %v1033 = vld [vmem:[#allocation2 + $0x18] sm:$0xff]
  %v1034 = vld [vmem:[#allocation2 + $0x20] sm:$0xff]
  %v1035 = vld [vmem:[#allocation2 + $0x28] sm:$0xff]
  %v1036 = vld [vmem:[#allocation2 + $0x30] sm:$0xff]
  %v1037 = vld [vmem:[#allocation2 + $0x38] sm:$0xff]
  %v1038 = vld [vmem:[#allocation2 + $0x40] sm:$0xff]
  %v1039 = vld [vmem:[#allocation2 + $0x48] sm:$0xff]
  %v1040 = vld [vmem:[#allocation2 + $0x50] sm:$0xff]
  %v1041 = vld [vmem:[#allocation2 + $0x58] sm:$0xff]
  %v1042 = vld [vmem:[#allocation2 + $0x60] sm:$0xff]
  %v1043 = vld [vmem:[#allocation2 + $0x68] sm:$0xff]
  %v1044 = vld [vmem:[#allocation2 + $0x70] sm:$0xff]
  %v1045 = vld [vmem:[#allocation2 + $0x78] sm:$0xff]
  %v1046 = vld [vmem:[#allocation2 + $0x80] sm:$0xff]
  %v1047 = vld [vmem:[#allocation2 + $0x88] sm:$0xff]
  %v1048 = vld [vmem:[#allocation2 + $0x90] sm:$0xff]
  %v1049 = vld [vmem:[#allocation2 + $0x98] sm:$0xff]
  %v1050 = vld [vmem:[#allocation2 + $0xa0] sm:$0xff]
  %v1051 = vld [vmem:[#allocation2 + $0xa8] sm:$0xff]
  %v1052 = vld [vmem:[#allocation2 + $0xb0] sm:$0xff]
  %v1053 = vld [vmem:[#allocation2 + $0xb8] sm:$0xff]
  %v1054 = vld [vmem:[#allocation2 + $0xc0] sm:$0xff]
  %v1055 = vld [vmem:[#allocation2 + $0xc8] sm:$0xff]
  %v1056 = vld [vmem:[#allocation2 + $0xd0] sm:$0xff]
  %v1057 = vld [vmem:[#allocation2 + $0xd8] sm:$0xff]
  %v1058 = vld [vmem:[#allocation2 + $0xe0] sm:$0xff]
  %v1059 = vld [vmem:[#allocation2 + $0xe8] sm:$0xff]
  %v1060 = vld [vmem:[#allocation2 + $0xf0] sm:$0xff]
  %v1061 = vld [vmem:[#allocation2 + $0xf8] sm:$0xff]
  %1062 = vmatprep.subr.mxu0 0.0
  %1063 = vmatpush1.msra.mxu0 %v1030
  %1064 = vmatprep.subr.mxu0 0.0
  %1065 = vmatpush1.msra.mxu0 %v1031
  %1066 = vmatprep.subr.mxu0 0.0
  %1067 = vmatpush1.msra.mxu0 %v1032
  %1068 = vmatprep.subr.mxu0 0.0
  %1069 = vmatpush1.msra.mxu0 %v1033
  %1070 = vmatprep.subr.mxu0 0.0
  %1071 = vmatpush1.msra.mxu0 %v1034
  %1072 = vmatprep.subr.mxu0 0.0
  %1073 = vmatpush1.msra.mxu0 %v1035
  %1074 = vmatprep.subr.mxu0 0.0
  %1075 = vmatpush1.msra.mxu0 %v1036
  %1076 = vmatprep.subr.mxu0 0.0
  %1077 = vmatpush1.msra.mxu0 %v1037
  %1078 = vmatprep.subr.mxu0 0.0
  %1079 = vmatpush1.msra.mxu0 %v1038
  %1080 = vmatprep.subr.mxu0 0.0
  %1081 = vmatpush1.msra.mxu0 %v1039
  %1082 = vmatprep.subr.mxu0 0.0
  %1083 = vmatpush1.msra.mxu0 %v1040
  %1084 = vmatprep.subr.mxu0 0.0
  %1085 = vmatpush1.msra.mxu0 %v1041
  %1086 = vmatprep.subr.mxu0 0.0
  %1087 = vmatpush1.msra.mxu0 %v1042
  %1088 = vmatprep.subr.mxu0 0.0
  %1089 = vmatpush1.msra.mxu0 %v1043
  %1090 = vmatprep.subr.mxu0 0.0
  %1091 = vmatpush1.msra.mxu0 %v1044
  %1092 = vmatprep.subr.mxu0 0.0
  %1093 = vmatpush1.msra.mxu0 %v1045
  %1094 = vmatprep.subr.mxu0 0.0
  %1095 = vmatpush1.msra.mxu0 %v1046
  %1096 = vmatprep.subr.mxu0 0.0
  %1097 = vmatpush1.msra.mxu0 %v1047
  %1098 = vmatprep.subr.mxu0 0.0
  %1099 = vmatpush1.msra.mxu0 %v1048
  %1100 = vmatprep.subr.mxu0 0.0
  %1101 = vmatpush1.msra.mxu0 %v1049
  %1102 = vmatprep.subr.mxu0 0.0
  %1103 = vmatpush1.msra.mxu0 %v1050
  %1104 = vmatprep.subr.mxu0 0.0
  %1105 = vmatpush1.msra.mxu0 %v1051
  %1106 = vmatprep.subr.mxu0 0.0
  %1107 = vmatpush1.msra.mxu0 %v1052
  %1108 = vmatprep.subr.mxu0 0.0
  %1109 = vmatpush1.msra.mxu0 %v1053
  %1110 = vmatprep.subr.mxu0 0.0
  %1111 = vmatpush1.msra.mxu0 %v1054
  %1112 = vmatprep.subr.mxu0 0.0
  %1113 = vmatpush1.msra.mxu0 %v1055
  %1114 = vmatprep.subr.mxu0 0.0
  %1115 = vmatpush1.msra.mxu0 %v1056
  %1116 = vmatprep.subr.mxu0 0.0
  %1117 = vmatpush1.msra.mxu0 %v1057
  %1118 = vmatprep.subr.mxu0 0.0
  %1119 = vmatpush1.msra.mxu0 %v1058
  %1120 = vmatprep.subr.mxu0 0.0
  %1121 = vmatpush1.msra.mxu0 %v1059
  %1122 = vmatprep.subr.mxu0 0.0
  %1123 = vmatpush1.msra.mxu0 %v1060
  %1124 = vmatprep.subr.mxu0 0.0
  %1125 = vmatpush1.msra.mxu0 %v1061
  %1126 = vmatprep.mubr.f32.mxu0 %v1023
  %1127 = vmatmul.mubr.f32.gmra.mrb[0].mxu0 %v1022
  %v1128 = vpop.f32.mrb[0].mxu0
  %v1129 = vadd.f32 0.0, %v1128
  %v1130 = vpop.f32.mrb[0].mxu0
  %1131 = vmatprep.mubr.f32.mxu0 %v1025
  %1132 = vmatmul.mubr.f32.gmra.mrb[0].mxu0 %v1024
  %v1133 = vpop.f32.mrb[0].mxu0
  %v1134 = vadd.f32 0.0, %v1133
  %v1135 = vpop.f32.mrb[0].mxu0
  %1136 = vmatprep.mubr.f32.mxu0 %v1027
  %1137 = vmatmul.mubr.f32.gmra.mrb[0].mxu0 %v1026
  %v1138 = vpop.f32.mrb[0].mxu0
  %v1139 = vadd.f32 0.0, %v1138
  %v1140 = vpop.f32.mrb[0].mxu0
  %1141 = vmatprep.mubr.f32.mxu0 %v1029
  %1142 = vmatmul.mubr.f32.gmra.mrb[0].mxu0 %v1028
  %v1143 = vpop.f32.mrb[0].mxu0
  %v1144 = vadd.f32 0.0, %v1143
  %v1145 = vpop.f32.mrb[0].mxu0
  %1146 = vdwg.mxu0
  %v1147 = vmul.f32 %v351, %v1129
  %v1148 = vmul.f32 %v357, %v1134
  %v1149 = vmul.f32 %v363, %v1139
  %v1150 = vmul.f32 %v369, %v1144
  %v1151 = vld [vmem:[%s7] sm:$0xff]
  %v1152 = vld [vmem:[%s7 + $0x8] sm:$0xff]
  %v1153 = vld [vmem:[%s7 + $0x10] sm:$0xff]
  %v1154 = vld [vmem:[%s7 + $0x18] sm:$0xff]
  %v1155 = vld [vmem:[%s7 + $0x20] sm:$0xff]
  %v1156 = vld [vmem:[%s7 + $0x28] sm:$0xff]
  %v1157 = vld [vmem:[%s7 + $0x30] sm:$0xff]
  %v1158 = vld [vmem:[%s7 + $0x38] sm:$0xff]
  %v1159 = vld [vmem:[%s7 + $0x40] sm:$0xff]
  %v1160 = vld [vmem:[%s7 + $0x48] sm:$0xff]
  %v1161 = vld [vmem:[%s7 + $0x50] sm:$0xff]
  %v1162 = vld [vmem:[%s7 + $0x58] sm:$0xff]
  %v1163 = vld [vmem:[%s7 + $0x60] sm:$0xff]
  %v1164 = vld [vmem:[%s7 + $0x68] sm:$0xff]
  %v1165 = vld [vmem:[%s7 + $0x70] sm:$0xff]
  %v1166 = vld [vmem:[%s7 + $0x78] sm:$0xff]
  %v1167 = vld [vmem:[%s8] sm:$0x1]
  %v1169 = vlaneseq
  %v1170 = vshrl.u32 %v1169, 7
  %v1171 = vsub.s32 0, %v1170
  %v1172 = vrot.slane %v1167, %v1171
  %1174 = vmatprep.subr.mxu0 0.0
  %1175 = vmatpush1.msra.mxu0 %v1151
  %1176 = vmatprep.subr.mxu0 0.0
  %1177 = vmatpush1.msra.mxu0 %v1152
  %1178 = vmatprep.subr.mxu0 0.0
  %1179 = vmatpush1.msra.mxu0 %v1153
  %1180 = vmatprep.subr.mxu0 0.0
  %1181 = vmatpush1.msra.mxu0 %v1154
  %1182 = vmatprep.subr.mxu0 0.0
  %1183 = vmatpush1.msra.mxu0 %v1155
  %1184 = vmatprep.subr.mxu0 0.0
  %1185 = vmatpush1.msra.mxu0 %v1156
  %1186 = vmatprep.subr.mxu0 0.0
  %1187 = vmatpush1.msra.mxu0 %v1157
  %1188 = vmatprep.subr.mxu0 0.0
  %1189 = vmatpush1.msra.mxu0 %v1158
  %1190 = vmatprep.subr.mxu0 0.0
  %1191 = vmatpush1.msra.mxu0 %v1159
  %1192 = vmatprep.subr.mxu0 0.0
  %1193 = vmatpush1.msra.mxu0 %v1160
  %1194 = vmatprep.subr.mxu0 0.0
  %1195 = vmatpush1.msra.mxu0 %v1161
  %1196 = vmatprep.subr.mxu0 0.0
  %1197 = vmatpush1.msra.mxu0 %v1162
  %1198 = vmatprep.subr.mxu0 0.0
  %1199 = vmatpush1.msra.mxu0 %v1163
  %1200 = vmatprep.subr.mxu0 0.0
  %1201 = vmatpush1.msra.mxu0 %v1164
  %1202 = vmatprep.subr.mxu0 0.0
  %1203 = vmatpush1.msra.mxu0 %v1165
  %1204 = vmatprep.subr.mxu0 0.0
  %1205 = vmatpush1.msra.mxu0 %v1166
  %1206 = vmatprep.subr.mxu0 0.0
  %1207 = vmatpush1.msra.mxu0 0.0
  %1208 = vmatprep.subr.mxu0 0.0
  %1209 = vmatpush1.msra.mxu0 0.0
  %1210 = vmatprep.subr.mxu0 0.0
  %1211 = vmatpush1.msra.mxu0 0.0
  %1212 = vmatprep.subr.mxu0 0.0
  %1213 = vmatpush1.msra.mxu0 0.0
  %1214 = vmatprep.subr.mxu0 0.0
  %1215 = vmatpush1.msra.mxu0 0.0
  %1216 = vmatprep.subr.mxu0 0.0
  %1217 = vmatpush1.msra.mxu0 0.0
  %1218 = vmatprep.subr.mxu0 0.0
  %1219 = vmatpush1.msra.mxu0 0.0
  %1220 = vmatprep.subr.mxu0 0.0
  %1221 = vmatpush1.msra.mxu0 0.0
  %1222 = vmatprep.subr.mxu0 0.0
  %1223 = vmatpush1.msra.mxu0 0.0
  %1224 = vmatprep.subr.mxu0 0.0
  %1225 = vmatpush1.msra.mxu0 0.0
  %1226 = vmatprep.subr.mxu0 0.0
  %1227 = vmatpush1.msra.mxu0 0.0
  %1228 = vmatprep.subr.mxu0 0.0
  %1229 = vmatpush1.msra.mxu0 0.0
  %1230 = vmatprep.subr.mxu0 0.0
  %1231 = vmatpush1.msra.mxu0 0.0
  %1232 = vmatprep.subr.mxu0 0.0
  %1233 = vmatpush1.msra.mxu0 0.0
  %1234 = vmatprep.subr.mxu0 0.0
  %1235 = vmatpush1.msra.mxu0 0.0
  %1236 = vmatprep.subr.mxu0 0.0
  %1237 = vmatpush1.msra.mxu0 0.0
  %1238 = vmatprep.mubr.f32.mxu0 0.0
  %1239 = vmatmul.mubr.f32.gmra.mrb[0].mxu0 %v1147
  %v1240 = vpop.f32.mrb[0].mxu0
  %v1241 = vadd.f32 %v1172, %v1240
  %v1242 = vpop.f32.mrb[0].mxu0
  %1243 = vmatprep.mubr.f32.mxu0 0.0
  %1244 = vmatmul.mubr.f32.gmra.mrb[0].mxu0 %v1148
  %v1245 = vpop.f32.mrb[0].mxu0
  %v1246 = vadd.f32 %v1172, %v1245
  %v1247 = vpop.f32.mrb[0].mxu0
  %1248 = vmatprep.mubr.f32.mxu0 0.0
  %1249 = vmatmul.mubr.f32.gmra.mrb[0].mxu0 %v1149
  %v1250 = vpop.f32.mrb[0].mxu0
  %v1251 = vadd.f32 %v1172, %v1250
  %v1252 = vpop.f32.mrb[0].mxu0
  %1253 = vmatprep.mubr.f32.mxu0 0.0
  %1254 = vmatmul.mubr.f32.gmra.mrb[0].mxu0 %v1150
  %v1255 = vpop.f32.mrb[0].mxu0
  %v1256 = vadd.f32 %v1172, %v1255
  %v1257 = vpop.f32.mrb[0].mxu0
  %1258 = vdwg.mxu0
  %v1259 = vld [vmem:[%s0] sm:$0xff]
  %v1260 = vld [vmem:[%s0 + $0x8] sm:$0xff]
  %v1261 = vld [vmem:[%s0 + $0x10] sm:$0xff]
  %v1262 = vld [vmem:[%s0 + $0x18] sm:$0xff]
  %v1263 = vadd.f32 %v1241, %v1259
  %v1264 = vadd.f32 %v1246, %v1260
  %v1265 = vadd.f32 %v1251, %v1261
  %v1266 = vadd.f32 %v1256, %v1262
  %1267 = vst [vmem:[%s9] sm:$0xff] %v1263
  %1268 = vst [vmem:[%s9 + $0x8] sm:$0xff] %v1264
  %1269 = vst [vmem:[%s9 + $0x10] sm:$0xff] %v1265
  %1270 = vst [vmem:[%s9 + $0x18] sm:$0xff] %v1266
  // Predicated region
  $region38: #{gsau_forward.1} parent=0 // pred_check
    _
  $region39: #{gsau_forward.1} parent=0 // pred_check_branch
    %1272 = sbr.rel (0) target = $region41
  $region40: #{gsau_forward.1} parent=0 // pred_region
    _
  $region41: #{gsau_forward.1} parent=0 // pred_fallthru
    _
  // Predicated region
  $region42: #{gsau_forward.1} parent=0 // pred_check
    _
  $region43: #{gsau_forward.1} parent=0 // pred_check_branch
    %1274 = sbr.rel (0) target = $region45
  $region44: #{gsau_forward.1} parent=0 // pred_region
    _
  $region45: #{gsau_forward.1} parent=0 // pred_fallthru
    _

</llo_original>
